<compile_context>
chip_gen: v7x
topology: tpu7x:2x2x1
jax: 0.10.0
libtpu: 0.0.40
codegen_flags: <defaults>
</compile_context>

<pallas_src>
import functools

import jax
import jax.numpy as jnp
from jax.experimental import pallas as pl
from jax.experimental.pallas import tpu as pltpu

LANE = 128     # padded width of the hidden layers
IN_PAD = 8     # padded width of the 2-feature input
OUT_PAD = 8    # padded width of the 7-feature output
TB = 256       # batch rows per grid step


def _mlp_kernel(x_ref,
                w0, b0, w1, b1, w2, b2, w3, b3, w4, b4, w5, b5, w6, b6,
                o_ref):
    """Entire MLP forward for one (TB, IN_PAD) batch tile, resident in VMEM."""

    def layer(h, w_ref, b_ref, activate):
        w = w_ref[...]
        # Matmul in the weight dtype (f32 or bf16), accumulate in f32.
        z = jnp.dot(h.astype(w.dtype), w, preferred_element_type=jnp.float32)
        z = z + b_ref[...].astype(jnp.float32)      # (TB, n) + (1, n) broadcast
        return jnp.tanh(z) if activate else z       # elementwise stays f32

    h = x_ref[...].astype(jnp.float32)              # (TB, IN_PAD)
    h = layer(h, w0, b0, True)                      # (TB, 128)
    h = layer(h, w1, b1, True)
    h = layer(h, w2, b2, True)
    h = layer(h, w3, b3, True)
    h = layer(h, w4, b4, True)
    h = layer(h, w5, b5, True)
    h = layer(h, w6, b6, False)                     # (TB, OUT_PAD), no tanh
    o_ref[...] = h.astype(o_ref.dtype)


def _pad2(a, rows, cols):
    out = jnp.zeros((rows, cols), a.dtype)
    return out.at[: a.shape[0], : a.shape[1]].set(a)


@functools.partial(jax.jit, static_argnames=("out_dim", "weight_dtype"))
def mlp_forward(x, params, out_dim=7, weight_dtype=jnp.float32):
    """x: (B, 2) float32.  params: list of (W, b) with W stored as (in, out),
    so the kernel computes y = x @ W + b (same math as PyTorch x @ W.T + b)."""
    B = x.shape[0]
    # Pad the batch to a multiple of 2*TB so the parallel grid axis has an
    # even number of steps (lets v7x shard it across both TensorCores).
    step = 2 * TB
    B_pad = ((B + step - 1) // step) * step

    x_pad = _pad2(x.astype(jnp.float32), B_pad, IN_PAD)

    n_layers = len(params)
    flat_args = []
    for li, (w, b) in enumerate(params):
        w_rows = IN_PAD if li == 0 else LANE
        w_cols = OUT_PAD if li == n_layers - 1 else LANE
        flat_args.append(_pad2(w.astype(weight_dtype), w_rows, w_cols))
        # Biases stay f32: bias-add / tanh run on the VPU/EUP in f32.
        flat_args.append(_pad2(b.astype(jnp.float32).reshape(1, -1), 1, w_cols))

    grid = (B_pad // TB,)

    in_specs = [pl.BlockSpec((TB, IN_PAD), lambda i: (i, 0))]
    for a in flat_args:
        # Full-array blocks with a constant index map -> resident in VMEM,
        # no per-step re-DMA.
        in_specs.append(pl.BlockSpec(a.shape, lambda i: (0, 0)))

    out_pad = pl.pallas_call(
        _mlp_kernel,
        out_shape=jax.ShapeDtypeStruct((B_pad, OUT_PAD), jnp.float32),
        grid_spec=pltpu.PrefetchScalarGridSpec(
            num_scalar_prefetch=0,
            grid=grid,
            in_specs=in_specs,
            out_specs=pl.BlockSpec((TB, OUT_PAD), lambda i: (i, 0)),
        ),
        compiler_params=pltpu.CompilerParams(
            dimension_semantics=("parallel",)),
    )(x_pad, *flat_args)

    return out_pad[:B, :out_dim]


def init_params(key, NN=32):
    """Deterministic init matching the PyTorch layer shapes.
    Weights stored as (in_dim, out_dim) so the kernel does x @ W + b."""
    dims = [2, NN, NN // 2, NN // 4, NN // 4, NN // 4, NN // 4, 7]
    params = []
    for li in range(len(dims) - 1):
        fan_in, fan_out = dims[li], dims[li + 1]
        key, kw, kb = jax.random.split(key, 3)
        bound = 1.0 / (fan_in ** 0.5)
        w = jax.random.uniform(kw, (fan_in, fan_out), jnp.float32, -bound, bound)
        b = jax.random.uniform(kb, (fan_out,), jnp.float32, -bound, bound)
        params.append((w, b))
    return params


def reference_forward(x, params, weight_dtype=jnp.float32):
    """Pure-JAX reference applying the same dtype policy as the kernel."""
    h = x.astype(jnp.float32)
    n = len(params)
    for i, (w, b) in enumerate(params):
        z = jnp.dot(h.astype(weight_dtype), w.astype(weight_dtype),
                    preferred_element_type=jnp.float32)
        h = z + b.astype(jnp.float32)
        if i < n - 1:
            h = jnp.tanh(h)
    return h


if __name__ == "__main__":
    NN = 32
    B = 500                      # deliberately not a multiple of the batch tile
    key = jax.random.PRNGKey(0)
    kx, kp = jax.random.split(key)

    x = jax.random.uniform(kx, (B, 2), jnp.float32, -1.0, 1.0)
    params = init_params(kp, NN)

    # f32 path: exact match against the f32 reference.
    out_f32 = jax.block_until_ready(mlp_forward(x, params))
    ref_f32 = reference_forward(x, params)
    assert out_f32.shape == (B, 7), out_f32.shape
    err_f32 = float(jnp.max(jnp.abs(out_f32 - ref_f32)))
    assert err_f32 < 1e-4, err_f32

    # bf16-weight fast path (v6e/v7x MXU): validate against a reference that
    # applies the same casts (bf16 operands, f32 accumulation, f32 tanh).
    out_bf16 = jax.block_until_ready(
        mlp_forward(x, params, weight_dtype=jnp.bfloat16))
    ref_bf16 = reference_forward(x, params, weight_dtype=jnp.bfloat16)
    err_bf16 = float(jnp.max(jnp.abs(out_bf16 - ref_bf16)))
    assert err_bf16 < 2e-2, err_bf16

    print("KERNEL_OK")
</pallas_src>

<mosaic_0001>
module attributes {stable_mosaic.version = 11 : i64} {
  func.func @_mlp_kernel(%arg0: i32, %arg1: memref<256x8xf32, #tpu.memory_space<vmem>>, %arg2: memref<8x128xf32, #tpu.memory_space<vmem>>, %arg3: memref<1x128xf32, #tpu.memory_space<vmem>>, %arg4: memref<128x128xf32, #tpu.memory_space<vmem>>, %arg5: memref<1x128xf32, #tpu.memory_space<vmem>>, %arg6: memref<128x128xf32, #tpu.memory_space<vmem>>, %arg7: memref<1x128xf32, #tpu.memory_space<vmem>>, %arg8: memref<128x128xf32, #tpu.memory_space<vmem>>, %arg9: memref<1x128xf32, #tpu.memory_space<vmem>>, %arg10: memref<128x128xf32, #tpu.memory_space<vmem>>, %arg11: memref<1x128xf32, #tpu.memory_space<vmem>>, %arg12: memref<128x128xf32, #tpu.memory_space<vmem>>, %arg13: memref<1x128xf32, #tpu.memory_space<vmem>>, %arg14: memref<128x8xf32, #tpu.memory_space<vmem>>, %arg15: memref<1x8xf32, #tpu.memory_space<vmem>>, %arg16: memref<256x8xf32, #tpu.memory_space<vmem>>) attributes {dimension_semantics = [#tpu.dimension_semantics<parallel>], iteration_bounds = array<i64: 2>, scalar_prefetch = 0 : i64, scratch_operands = 0 : i64, tpu.core_type = #tpu.core_type<tc>, window_params = [{transform_indices = @transform_0, window_bounds = array<i64: 256, 8>}, {pipeline_mode = #tpu.pipeline_mode<synchronous>, transform_indices = @transform_1, window_bounds = array<i64: 8, 128>}, {pipeline_mode = #tpu.pipeline_mode<synchronous>, transform_indices = @transform_2, window_bounds = array<i64: 1, 128>}, {pipeline_mode = #tpu.pipeline_mode<synchronous>, transform_indices = @transform_3, window_bounds = array<i64: 128, 128>}, {pipeline_mode = #tpu.pipeline_mode<synchronous>, transform_indices = @transform_4, window_bounds = array<i64: 1, 128>}, {pipeline_mode = #tpu.pipeline_mode<synchronous>, transform_indices = @transform_5, window_bounds = array<i64: 128, 128>}, {pipeline_mode = #tpu.pipeline_mode<synchronous>, transform_indices = @transform_6, window_bounds = array<i64: 1, 128>}, {pipeline_mode = #tpu.pipeline_mode<synchronous>, transform_indices = @transform_7, window_bounds = array<i64: 128, 128>}, {pipeline_mode = #tpu.pipeline_mode<synchronous>, transform_indices = @transform_8, window_bounds = array<i64: 1, 128>}, {pipeline_mode = #tpu.pipeline_mode<synchronous>, transform_indices = @transform_9, window_bounds = array<i64: 128, 128>}, {pipeline_mode = #tpu.pipeline_mode<synchronous>, transform_indices = @transform_10, window_bounds = array<i64: 1, 128>}, {pipeline_mode = #tpu.pipeline_mode<synchronous>, transform_indices = @transform_11, window_bounds = array<i64: 128, 128>}, {pipeline_mode = #tpu.pipeline_mode<synchronous>, transform_indices = @transform_12, window_bounds = array<i64: 1, 128>}, {pipeline_mode = #tpu.pipeline_mode<synchronous>, transform_indices = @transform_13, window_bounds = array<i64: 128, 8>}, {pipeline_mode = #tpu.pipeline_mode<synchronous>, transform_indices = @transform_14, window_bounds = array<i64: 1, 8>}, {transform_indices = @transform_15, window_bounds = array<i64: 256, 8>}]} {
    %c0 = arith.constant 0 : index
    %c0_0 = arith.constant 0 : index
    %0 = vector.load %arg1[%c0, %c0_0] : memref<256x8xf32, #tpu.memory_space<vmem>>, vector<256x8xf32>
    %c0_1 = arith.constant 0 : index
    %c0_2 = arith.constant 0 : index
    %1 = vector.load %arg2[%c0_1, %c0_2] : memref<8x128xf32, #tpu.memory_space<vmem>>, vector<8x128xf32>
    %cst = arith.constant dense<0.000000e+00> : vector<256x128xf32>
    %2 = tpu.matmul %0, %1, %cst {dimension_numbers = #tpu.dot_dimension_numbers<[1], [0], [0], [1], [0, 0, 1, 1], [], []>} : vector<256x8xf32>, vector<8x128xf32>, vector<256x128xf32> -> vector<256x128xf32>
    %c0_3 = arith.constant 0 : index
    %c0_4 = arith.constant 0 : index
    %3 = vector.load %arg3[%c0_3, %c0_4] : memref<1x128xf32, #tpu.memory_space<vmem>>, vector<1x128xf32>
    %4 = vector.broadcast %3 : vector<1x128xf32> to vector<256x128xf32>
    %5 = arith.addf %2, %4 : vector<256x128xf32>
    %6 = math.tanh %5 : vector<256x128xf32>
    %c0_5 = arith.constant 0 : index
    %c0_6 = arith.constant 0 : index
    %7 = vector.load %arg4[%c0_5, %c0_6] : memref<128x128xf32, #tpu.memory_space<vmem>>, vector<128x128xf32>
    %cst_7 = arith.constant dense<0.000000e+00> : vector<256x128xf32>
    %8 = tpu.matmul %6, %7, %cst_7 {dimension_numbers = #tpu.dot_dimension_numbers<[1], [0], [0], [1], [0, 0, 1, 1], [], []>} : vector<256x128xf32>, vector<128x128xf32>, vector<256x128xf32> -> vector<256x128xf32>
    %c0_8 = arith.constant 0 : index
    %c0_9 = arith.constant 0 : index
    %9 = vector.load %arg5[%c0_8, %c0_9] : memref<1x128xf32, #tpu.memory_space<vmem>>, vector<1x128xf32>
    %10 = vector.broadcast %9 : vector<1x128xf32> to vector<256x128xf32>
    %11 = arith.addf %8, %10 : vector<256x128xf32>
    %12 = math.tanh %11 : vector<256x128xf32>
    %c0_10 = arith.constant 0 : index
    %c0_11 = arith.constant 0 : index
    %13 = vector.load %arg6[%c0_10, %c0_11] : memref<128x128xf32, #tpu.memory_space<vmem>>, vector<128x128xf32>
    %cst_12 = arith.constant dense<0.000000e+00> : vector<256x128xf32>
    %14 = tpu.matmul %12, %13, %cst_12 {dimension_numbers = #tpu.dot_dimension_numbers<[1], [0], [0], [1], [0, 0, 1, 1], [], []>} : vector<256x128xf32>, vector<128x128xf32>, vector<256x128xf32> -> vector<256x128xf32>
    %c0_13 = arith.constant 0 : index
    %c0_14 = arith.constant 0 : index
    %15 = vector.load %arg7[%c0_13, %c0_14] : memref<1x128xf32, #tpu.memory_space<vmem>>, vector<1x128xf32>
    %16 = vector.broadcast %15 : vector<1x128xf32> to vector<256x128xf32>
    %17 = arith.addf %14, %16 : vector<256x128xf32>
    %18 = math.tanh %17 : vector<256x128xf32>
    %c0_15 = arith.constant 0 : index
    %c0_16 = arith.constant 0 : index
    %19 = vector.load %arg8[%c0_15, %c0_16] : memref<128x128xf32, #tpu.memory_space<vmem>>, vector<128x128xf32>
    %cst_17 = arith.constant dense<0.000000e+00> : vector<256x128xf32>
    %20 = tpu.matmul %18, %19, %cst_17 {dimension_numbers = #tpu.dot_dimension_numbers<[1], [0], [0], [1], [0, 0, 1, 1], [], []>} : vector<256x128xf32>, vector<128x128xf32>, vector<256x128xf32> -> vector<256x128xf32>
    %c0_18 = arith.constant 0 : index
    %c0_19 = arith.constant 0 : index
    %21 = vector.load %arg9[%c0_18, %c0_19] : memref<1x128xf32, #tpu.memory_space<vmem>>, vector<1x128xf32>
    %22 = vector.broadcast %21 : vector<1x128xf32> to vector<256x128xf32>
    %23 = arith.addf %20, %22 : vector<256x128xf32>
    %24 = math.tanh %23 : vector<256x128xf32>
    %c0_20 = arith.constant 0 : index
    %c0_21 = arith.constant 0 : index
    %25 = vector.load %arg10[%c0_20, %c0_21] : memref<128x128xf32, #tpu.memory_space<vmem>>, vector<128x128xf32>
    %cst_22 = arith.constant dense<0.000000e+00> : vector<256x128xf32>
    %26 = tpu.matmul %24, %25, %cst_22 {dimension_numbers = #tpu.dot_dimension_numbers<[1], [0], [0], [1], [0, 0, 1, 1], [], []>} : vector<256x128xf32>, vector<128x128xf32>, vector<256x128xf32> -> vector<256x128xf32>
    %c0_23 = arith.constant 0 : index
    %c0_24 = arith.constant 0 : index
    %27 = vector.load %arg11[%c0_23, %c0_24] : memref<1x128xf32, #tpu.memory_space<vmem>>, vector<1x128xf32>
    %28 = vector.broadcast %27 : vector<1x128xf32> to vector<256x128xf32>
    %29 = arith.addf %26, %28 : vector<256x128xf32>
    %30 = math.tanh %29 : vector<256x128xf32>
    %c0_25 = arith.constant 0 : index
    %c0_26 = arith.constant 0 : index
    %31 = vector.load %arg12[%c0_25, %c0_26] : memref<128x128xf32, #tpu.memory_space<vmem>>, vector<128x128xf32>
    %cst_27 = arith.constant dense<0.000000e+00> : vector<256x128xf32>
    %32 = tpu.matmul %30, %31, %cst_27 {dimension_numbers = #tpu.dot_dimension_numbers<[1], [0], [0], [1], [0, 0, 1, 1], [], []>} : vector<256x128xf32>, vector<128x128xf32>, vector<256x128xf32> -> vector<256x128xf32>
    %c0_28 = arith.constant 0 : index
    %c0_29 = arith.constant 0 : index
    %33 = vector.load %arg13[%c0_28, %c0_29] : memref<1x128xf32, #tpu.memory_space<vmem>>, vector<1x128xf32>
    %34 = vector.broadcast %33 : vector<1x128xf32> to vector<256x128xf32>
    %35 = arith.addf %32, %34 : vector<256x128xf32>
    %36 = math.tanh %35 : vector<256x128xf32>
    %c0_30 = arith.constant 0 : index
    %c0_31 = arith.constant 0 : index
    %37 = vector.load %arg14[%c0_30, %c0_31] : memref<128x8xf32, #tpu.memory_space<vmem>>, vector<128x8xf32>
    %cst_32 = arith.constant dense<0.000000e+00> : vector<256x8xf32>
    %38 = tpu.matmul %36, %37, %cst_32 {dimension_numbers = #tpu.dot_dimension_numbers<[1], [0], [0], [1], [0, 0, 1, 1], [], []>} : vector<256x128xf32>, vector<128x8xf32>, vector<256x8xf32> -> vector<256x8xf32>
    %c0_33 = arith.constant 0 : index
    %c0_34 = arith.constant 0 : index
    %39 = vector.load %arg15[%c0_33, %c0_34] : memref<1x8xf32, #tpu.memory_space<vmem>>, vector<1x8xf32>
    %40 = vector.broadcast %39 : vector<1x8xf32> to vector<256x8xf32>
    %41 = arith.addf %38, %40 : vector<256x8xf32>
    %c0_35 = arith.constant 0 : index
    %c0_36 = arith.constant 0 : index
    %42 = vector.load %arg16[%c0_35, %c0_36] : memref<256x8xf32, #tpu.memory_space<vmem>>, vector<256x8xf32>
    tpu.vector_store %arg16[%c0_35, %c0_36], %41 {strides = array<i32>} : memref<256x8xf32, #tpu.memory_space<vmem>>, vector<256x8xf32>,
    return
  }
  func.func @transform_0(%arg0: i32) -> (i32, i32) {
    %c0_i32 = arith.constant 0 : i32
    %c0_i32_0 = arith.constant 0 : i32
    return %arg0, %c0_i32 : i32, i32
  }
  func.func @transform_1(%arg0: i32) -> (i32, i32) {
    %c0_i32 = arith.constant 0 : i32
    %c0_i32_0 = arith.constant 0 : i32
    %c0_i32_1 = arith.constant 0 : i32
    return %c0_i32, %c0_i32_0 : i32, i32
  }
  func.func @transform_2(%arg0: i32) -> (i32, i32) {
    %c0_i32 = arith.constant 0 : i32
    %c0_i32_0 = arith.constant 0 : i32
    %c0_i32_1 = arith.constant 0 : i32
    return %c0_i32, %c0_i32_0 : i32, i32
  }
  func.func @transform_3(%arg0: i32) -> (i32, i32) {
    %c0_i32 = arith.constant 0 : i32
    %c0_i32_0 = arith.constant 0 : i32
    %c0_i32_1 = arith.constant 0 : i32
    return %c0_i32, %c0_i32_0 : i32, i32
  }
  func.func @transform_4(%arg0: i32) -> (i32, i32) {
    %c0_i32 = arith.constant 0 : i32
    %c0_i32_0 = arith.constant 0 : i32
    %c0_i32_1 = arith.constant 0 : i32
    return %c0_i32, %c0_i32_0 : i32, i32
  }
  func.func @transform_5(%arg0: i32) -> (i32, i32) {
    %c0_i32 = arith.constant 0 : i32
    %c0_i32_0 = arith.constant 0 : i32
    %c0_i32_1 = arith.constant 0 : i32
    return %c0_i32, %c0_i32_0 : i32, i32
  }
  func.func @transform_6(%arg0: i32) -> (i32, i32) {
    %c0_i32 = arith.constant 0 : i32
    %c0_i32_0 = arith.constant 0 : i32
    %c0_i32_1 = arith.constant 0 : i32
    return %c0_i32, %c0_i32_0 : i32, i32
  }
  func.func @transform_7(%arg0: i32) -> (i32, i32) {
    %c0_i32 = arith.constant 0 : i32
    %c0_i32_0 = arith.constant 0 : i32
    %c0_i32_1 = arith.constant 0 : i32
    return %c0_i32, %c0_i32_0 : i32, i32
  }
  func.func @transform_8(%arg0: i32) -> (i32, i32) {
    %c0_i32 = arith.constant 0 : i32
    %c0_i32_0 = arith.constant 0 : i32
    %c0_i32_1 = arith.constant 0 : i32
    return %c0_i32, %c0_i32_0 : i32, i32
  }
  func.func @transform_9(%arg0: i32) -> (i32, i32) {
    %c0_i32 = arith.constant 0 : i32
    %c0_i32_0 = arith.constant 0 : i32
    %c0_i32_1 = arith.constant 0 : i32
    return %c0_i32, %c0_i32_0 : i32, i32
  }
  func.func @transform_10(%arg0: i32) -> (i32, i32) {
    %c0_i32 = arith.constant 0 : i32
    %c0_i32_0 = arith.constant 0 : i32
    %c0_i32_1 = arith.constant 0 : i32
    return %c0_i32, %c0_i32_0 : i32, i32
  }
  func.func @transform_11(%arg0: i32) -> (i32, i32) {
    %c0_i32 = arith.constant 0 : i32
    %c0_i32_0 = arith.constant 0 : i32
    %c0_i32_1 = arith.constant 0 : i32
    return %c0_i32, %c0_i32_0 : i32, i32
  }
  func.func @transform_12(%arg0: i32) -> (i32, i32) {
    %c0_i32 = arith.constant 0 : i32
    %c0_i32_0 = arith.constant 0 : i32
    %c0_i32_1 = arith.constant 0 : i32
    return %c0_i32, %c0_i32_0 : i32, i32
  }
  func.func @transform_13(%arg0: i32) -> (i32, i32) {
    %c0_i32 = arith.constant 0 : i32
    %c0_i32_0 = arith.constant 0 : i32
    %c0_i32_1 = arith.constant 0 : i32
    return %c0_i32, %c0_i32_0 : i32, i32
  }
  func.func @transform_14(%arg0: i32) -> (i32, i32) {
    %c0_i32 = arith.constant 0 : i32
    %c0_i32_0 = arith.constant 0 : i32
    %c0_i32_1 = arith.constant 0 : i32
    return %c0_i32, %c0_i32_0 : i32, i32
  }
  func.func @transform_15(%arg0: i32) -> (i32, i32) {
    %c0_i32 = arith.constant 0 : i32
    %c0_i32_0 = arith.constant 0 : i32
    return %arg0, %c0_i32 : i32, i32
  }
}

</mosaic_0001>

<llo_original>
// kernel: mlp_forward.1
$region0: #{mlp_forward.1}
  #allocation0 [shape = 'u32[]', space=smem, size = 0x4, offset = 0x4, fixed_abs, tag = 'smem constant byte address 0x4 - core index']
  #allocation1 [shape = 'u32[144,128]{1,0:T(1,128)}', space=vmem, size = 0x12000, scoped, tag = 'internal scratch']
  %s0 = inlined_call_operand.vmem [shape: f32[512,8], index: 0, kind: input, shape index: {}]
  %s1 = inlined_call_operand.vmem [shape: f32[8,128], index: 1, kind: input, shape index: {}]
  %s2 = inlined_call_operand.vmem [shape: f32[1,128], index: 2, kind: input, shape index: {}]
  %s3 = inlined_call_operand.vmem [shape: f32[128,128], index: 3, kind: input, shape index: {}]
  %s4 = inlined_call_operand.vmem [shape: f32[1,128], index: 4, kind: input, shape index: {}]
  %s5 = inlined_call_operand.vmem [shape: f32[128,128], index: 5, kind: input, shape index: {}]
  %s6 = inlined_call_operand.vmem [shape: f32[1,128], index: 6, kind: input, shape index: {}]
  %s7 = inlined_call_operand.vmem [shape: f32[128,128], index: 7, kind: input, shape index: {}]
  %s8 = inlined_call_operand.vmem [shape: f32[1,128], index: 8, kind: input, shape index: {}]
  %s9 = inlined_call_operand.vmem [shape: f32[128,128], index: 9, kind: input, shape index: {}]
  %s10 = inlined_call_operand.vmem [shape: f32[1,128], index: 10, kind: input, shape index: {}]
  %s11 = inlined_call_operand.vmem [shape: f32[128,128], index: 11, kind: input, shape index: {}]
  %s12 = inlined_call_operand.vmem [shape: f32[1,128], index: 12, kind: input, shape index: {}]
  %s13 = inlined_call_operand.vmem [shape: f32[128,8], index: 13, kind: input, shape index: {}]
  %s14 = inlined_call_operand.vmem [shape: f32[1,8], index: 14, kind: input, shape index: {}]
  %s15 = inlined_call_operand.vmem [shape: f32[512,8], index: 15, kind: output, shape index: {}]
  %s16 = sld [smem:[#allocation0]]
  $region93: #{mlp_forward.1} parent=0
    _
  %s18 = ssub.s32 1, %s16
  %s19 = scalar_select 0, %s18, %s16
  loop: start=0, step=1, limit=4
  $region2: #{mlp_forward.1} parent=0 // loop_pre_header
    _
  $region3: #{mlp_forward.1} parent=0 // loop_header
    %s21 = sphi 0, %s25
    %p22 = scmp.ge.s32.totalorder %s21, 4
    %s31 = sphi 0, %s33
    %s34 = sphi 0, %s31
    %s35 = sphi 0, %s34
    %s51 = sphi 0, %s35
    %s55 = sphi 0, %s55
    %s57 = sphi 0, %s55
    %s58 = sphi 0, %s57
    %s72 = sphi 0, %s58
    %s76 = sphi 0, %s76
    %s78 = sphi 0, %s76
    %s79 = sphi 0, %s78
    %s93 = sphi 0, %s79
    %s97 = sphi 0, %s97
    %s99 = sphi 0, %s97
    %s100 = sphi 0, %s99
    %s114 = sphi 0, %s100
    %s118 = sphi 0, %s118
    %s120 = sphi 0, %s118
    %s121 = sphi 0, %s120
    %s135 = sphi 0, %s121
    %s139 = sphi 0, %s139
    %s141 = sphi 0, %s139
    %s142 = sphi 0, %s141
    %s156 = sphi 0, %s142
    %s160 = sphi 0, %s160
    %s162 = sphi 0, %s160
    %s163 = sphi 0, %s162
    %s177 = sphi 0, %s163
    %s181 = sphi 0, %s181
    %s183 = sphi 0, %s181
    %s184 = sphi 0, %s183
    %s198 = sphi 0, %s184
    %s202 = sphi 0, %s202
    %s204 = sphi 0, %s202
    %s205 = sphi 0, %s204
    %s219 = sphi 0, %s205
    %s223 = sphi 0, %s223
    %s225 = sphi 0, %s223
    %s226 = sphi 0, %s225
    %s240 = sphi 0, %s226
    %s244 = sphi 0, %s244
    %s246 = sphi 0, %s244
    %s247 = sphi 0, %s246
    %s261 = sphi 0, %s247
    %s265 = sphi 0, %s265
    %s267 = sphi 0, %s265
    %s268 = sphi 0, %s267
    %s282 = sphi 0, %s268
    %s286 = sphi 0, %s286
    %s288 = sphi 0, %s286
    %s289 = sphi 0, %s288
    %s303 = sphi 0, %s289
    %s307 = sphi 0, %s307
    %s309 = sphi 0, %s307
    %s310 = sphi 0, %s309
    %s324 = sphi 0, %s310
    %s328 = sphi 0, %s328
    %s330 = sphi 0, %s328
    %s331 = sphi 0, %s330
    %s345 = sphi 0, %s331
    %s351 = sphi 0, %s353
    %s354 = sphi 0, %s351
    %s355 = sphi 0, %s354
    %s371 = sphi 0, %s355
  $region4: #{mlp_forward.1} parent=0 // loop_header_branch
    %24 = sbr.rel (%p22) target = $region8
  $region5: #{mlp_forward.1} parent=0 // loop_body
    %s26 = ssub.s32 %s21, 1
    %s27 = ssub.s32 %s21, 2
    %s28 = sadd.s32 %s21, 1
    %s29 = ssub.s32 %s21, %s28
    %p30 = scmp.eq.s32.totalorder %s29, 0
    %s32 = sadd.s32 %s31, 1
    %s33 = scalar_select %p30, %s31, %s32
    %p36 = pneg %p30
    %p37 = scmp.eq.s32.totalorder %s21, 1
    %p38 = por %p36, %p37
    %p39 = scmp.ne.s32.totalorder %s31, %s34
    %p40 = scmp.eq.s32.totalorder %s21, 0
    %p41 = por %p39, %p40
    %p42 = scmp.ne.s32.totalorder %s31, %s34
    %p43 = scmp.eq.s32.totalorder %s26, 1
    %p44 = por %p42, %p43
    %p45 = scmp.ne.s32.totalorder %s34, %s35
    %p46 = scmp.eq.s32.totalorder %s26, 0
    %p47 = por %p45, %p46
    %p48 = scmp.ne.s32.totalorder %s34, %s35
    %p49 = scmp.eq.s32.totalorder %s27, 1
    %p50 = por %p48, %p49
    %p52 = scmp.ne.s32.totalorder %s35, %s51
    %p53 = scmp.eq.s32.totalorder %s27, 0
    %p54 = por %p52, %p53
    %s56 = sadd.s32 %s55, 1
    %p59 = scmp.eq.s32.totalorder %s21, 1
    %p60 = scmp.ne.s32.totalorder %s55, %s57
    %p61 = scmp.eq.s32.totalorder %s21, 0
    %p62 = por %p60, %p61
    %p63 = scmp.ne.s32.totalorder %s55, %s57
    %p64 = scmp.eq.s32.totalorder %s26, 1
    %p65 = por %p63, %p64
    %p66 = scmp.ne.s32.totalorder %s57, %s58
    %p67 = scmp.eq.s32.totalorder %s26, 0
    %p68 = por %p66, %p67
    %p69 = scmp.ne.s32.totalorder %s57, %s58
    %p70 = scmp.eq.s32.totalorder %s27, 1
    %p71 = por %p69, %p70
    %p73 = scmp.ne.s32.totalorder %s58, %s72
    %p74 = scmp.eq.s32.totalorder %s27, 0
    %p75 = por %p73, %p74
    %s77 = sadd.s32 %s76, 1
    %p80 = scmp.eq.s32.totalorder %s21, 1
    %p81 = scmp.ne.s32.totalorder %s76, %s78
    %p82 = scmp.eq.s32.totalorder %s21, 0
    %p83 = por %p81, %p82
    %p84 = scmp.ne.s32.totalorder %s76, %s78
    %p85 = scmp.eq.s32.totalorder %s26, 1
    %p86 = por %p84, %p85
    %p87 = scmp.ne.s32.totalorder %s78, %s79
    %p88 = scmp.eq.s32.totalorder %s26, 0
    %p89 = por %p87, %p88
    %p90 = scmp.ne.s32.totalorder %s78, %s79
    %p91 = scmp.eq.s32.totalorder %s27, 1
    %p92 = por %p90, %p91
    %p94 = scmp.ne.s32.totalorder %s79, %s93
    %p95 = scmp.eq.s32.totalorder %s27, 0
    %p96 = por %p94, %p95
    %s98 = sadd.s32 %s97, 1
    %p101 = scmp.eq.s32.totalorder %s21, 1
    %p102 = scmp.ne.s32.totalorder %s97, %s99
    %p103 = scmp.eq.s32.totalorder %s21, 0
    %p104 = por %p102, %p103
    %p105 = scmp.ne.s32.totalorder %s97, %s99
    %p106 = scmp.eq.s32.totalorder %s26, 1
    %p107 = por %p105, %p106
    %p108 = scmp.ne.s32.totalorder %s99, %s100
    %p109 = scmp.eq.s32.totalorder %s26, 0
    %p110 = por %p108, %p109
    %p111 = scmp.ne.s32.totalorder %s99, %s100
    %p112 = scmp.eq.s32.totalorder %s27, 1
    %p113 = por %p111, %p112
    %p115 = scmp.ne.s32.totalorder %s100, %s114
    %p116 = scmp.eq.s32.totalorder %s27, 0
    %p117 = por %p115, %p116
    %s119 = sadd.s32 %s118, 1
    %p122 = scmp.eq.s32.totalorder %s21, 1
    %p123 = scmp.ne.s32.totalorder %s118, %s120
    %p124 = scmp.eq.s32.totalorder %s21, 0
    %p125 = por %p123, %p124
    %p126 = scmp.ne.s32.totalorder %s118, %s120
    %p127 = scmp.eq.s32.totalorder %s26, 1
    %p128 = por %p126, %p127
    %p129 = scmp.ne.s32.totalorder %s120, %s121
    %p130 = scmp.eq.s32.totalorder %s26, 0
    %p131 = por %p129, %p130
    %p132 = scmp.ne.s32.totalorder %s120, %s121
    %p133 = scmp.eq.s32.totalorder %s27, 1
    %p134 = por %p132, %p133
    %p136 = scmp.ne.s32.totalorder %s121, %s135
    %p137 = scmp.eq.s32.totalorder %s27, 0
    %p138 = por %p136, %p137
    %s140 = sadd.s32 %s139, 1
    %p143 = scmp.eq.s32.totalorder %s21, 1
    %p144 = scmp.ne.s32.totalorder %s139, %s141
    %p145 = scmp.eq.s32.totalorder %s21, 0
    %p146 = por %p144, %p145
    %p147 = scmp.ne.s32.totalorder %s139, %s141
    %p148 = scmp.eq.s32.totalorder %s26, 1
    %p149 = por %p147, %p148
    %p150 = scmp.ne.s32.totalorder %s141, %s142
    %p151 = scmp.eq.s32.totalorder %s26, 0
    %p152 = por %p150, %p151
    %p153 = scmp.ne.s32.totalorder %s141, %s142
    %p154 = scmp.eq.s32.totalorder %s27, 1
    %p155 = por %p153, %p154
    %p157 = scmp.ne.s32.totalorder %s142, %s156
    %p158 = scmp.eq.s32.totalorder %s27, 0
    %p159 = por %p157, %p158
    %s161 = sadd.s32 %s160, 1
    %p164 = scmp.eq.s32.totalorder %s21, 1
    %p165 = scmp.ne.s32.totalorder %s160, %s162
    %p166 = scmp.eq.s32.totalorder %s21, 0
    %p167 = por %p165, %p166
    %p168 = scmp.ne.s32.totalorder %s160, %s162
    %p169 = scmp.eq.s32.totalorder %s26, 1
    %p170 = por %p168, %p169
    %p171 = scmp.ne.s32.totalorder %s162, %s163
    %p172 = scmp.eq.s32.totalorder %s26, 0
    %p173 = por %p171, %p172
    %p174 = scmp.ne.s32.totalorder %s162, %s163
    %p175 = scmp.eq.s32.totalorder %s27, 1
    %p176 = por %p174, %p175
    %p178 = scmp.ne.s32.totalorder %s163, %s177
    %p179 = scmp.eq.s32.totalorder %s27, 0
    %p180 = por %p178, %p179
    %s182 = sadd.s32 %s181, 1
    %p185 = scmp.eq.s32.totalorder %s21, 1
    %p186 = scmp.ne.s32.totalorder %s181, %s183
    %p187 = scmp.eq.s32.totalorder %s21, 0
    %p188 = por %p186, %p187
    %p189 = scmp.ne.s32.totalorder %s181, %s183
    %p190 = scmp.eq.s32.totalorder %s26, 1
    %p191 = por %p189, %p190
    %p192 = scmp.ne.s32.totalorder %s183, %s184
    %p193 = scmp.eq.s32.totalorder %s26, 0
    %p194 = por %p192, %p193
    %p195 = scmp.ne.s32.totalorder %s183, %s184
    %p196 = scmp.eq.s32.totalorder %s27, 1
    %p197 = por %p195, %p196
    %p199 = scmp.ne.s32.totalorder %s184, %s198
    %p200 = scmp.eq.s32.totalorder %s27, 0
    %p201 = por %p199, %p200
    %s203 = sadd.s32 %s202, 1
    %p206 = scmp.eq.s32.totalorder %s21, 1
    %p207 = scmp.ne.s32.totalorder %s202, %s204
    %p208 = scmp.eq.s32.totalorder %s21, 0
    %p209 = por %p207, %p208
    %p210 = scmp.ne.s32.totalorder %s202, %s204
    %p211 = scmp.eq.s32.totalorder %s26, 1
    %p212 = por %p210, %p211
    %p213 = scmp.ne.s32.totalorder %s204, %s205
    %p214 = scmp.eq.s32.totalorder %s26, 0
    %p215 = por %p213, %p214
    %p216 = scmp.ne.s32.totalorder %s204, %s205
    %p217 = scmp.eq.s32.totalorder %s27, 1
    %p218 = por %p216, %p217
    %p220 = scmp.ne.s32.totalorder %s205, %s219
    %p221 = scmp.eq.s32.totalorder %s27, 0
    %p222 = por %p220, %p221
    %s224 = sadd.s32 %s223, 1
    %p227 = scmp.eq.s32.totalorder %s21, 1
    %p228 = scmp.ne.s32.totalorder %s223, %s225
    %p229 = scmp.eq.s32.totalorder %s21, 0
    %p230 = por %p228, %p229
    %p231 = scmp.ne.s32.totalorder %s223, %s225
    %p232 = scmp.eq.s32.totalorder %s26, 1
    %p233 = por %p231, %p232
    %p234 = scmp.ne.s32.totalorder %s225, %s226
    %p235 = scmp.eq.s32.totalorder %s26, 0
    %p236 = por %p234, %p235
    %p237 = scmp.ne.s32.totalorder %s225, %s226
    %p238 = scmp.eq.s32.totalorder %s27, 1
    %p239 = por %p237, %p238
    %p241 = scmp.ne.s32.totalorder %s226, %s240
    %p242 = scmp.eq.s32.totalorder %s27, 0
    %p243 = por %p241, %p242
    %s245 = sadd.s32 %s244, 1
    %p248 = scmp.eq.s32.totalorder %s21, 1
    %p249 = scmp.ne.s32.totalorder %s244, %s246
    %p250 = scmp.eq.s32.totalorder %s21, 0
    %p251 = por %p249, %p250
    %p252 = scmp.ne.s32.totalorder %s244, %s246
    %p253 = scmp.eq.s32.totalorder %s26, 1
    %p254 = por %p252, %p253
    %p255 = scmp.ne.s32.totalorder %s246, %s247
    %p256 = scmp.eq.s32.totalorder %s26, 0
    %p257 = por %p255, %p256
    %p258 = scmp.ne.s32.totalorder %s246, %s247
    %p259 = scmp.eq.s32.totalorder %s27, 1
    %p260 = por %p258, %p259
    %p262 = scmp.ne.s32.totalorder %s247, %s261
    %p263 = scmp.eq.s32.totalorder %s27, 0
    %p264 = por %p262, %p263
    %s266 = sadd.s32 %s265, 1
    %p269 = scmp.eq.s32.totalorder %s21, 1
    %p270 = scmp.ne.s32.totalorder %s265, %s267
    %p271 = scmp.eq.s32.totalorder %s21, 0
    %p272 = por %p270, %p271
    %p273 = scmp.ne.s32.totalorder %s265, %s267
    %p274 = scmp.eq.s32.totalorder %s26, 1
    %p275 = por %p273, %p274
    %p276 = scmp.ne.s32.totalorder %s267, %s268
    %p277 = scmp.eq.s32.totalorder %s26, 0
    %p278 = por %p276, %p277
    %p279 = scmp.ne.s32.totalorder %s267, %s268
    %p280 = scmp.eq.s32.totalorder %s27, 1
    %p281 = por %p279, %p280
    %p283 = scmp.ne.s32.totalorder %s268, %s282
    %p284 = scmp.eq.s32.totalorder %s27, 0
    %p285 = por %p283, %p284
    %s287 = sadd.s32 %s286, 1
    %p290 = scmp.eq.s32.totalorder %s21, 1
    %p291 = scmp.ne.s32.totalorder %s286, %s288
    %p292 = scmp.eq.s32.totalorder %s21, 0
    %p293 = por %p291, %p292
    %p294 = scmp.ne.s32.totalorder %s286, %s288
    %p295 = scmp.eq.s32.totalorder %s26, 1
    %p296 = por %p294, %p295
    %p297 = scmp.ne.s32.totalorder %s288, %s289
    %p298 = scmp.eq.s32.totalorder %s26, 0
    %p299 = por %p297, %p298
    %p300 = scmp.ne.s32.totalorder %s288, %s289
    %p301 = scmp.eq.s32.totalorder %s27, 1
    %p302 = por %p300, %p301
    %p304 = scmp.ne.s32.totalorder %s289, %s303
    %p305 = scmp.eq.s32.totalorder %s27, 0
    %p306 = por %p304, %p305
    %s308 = sadd.s32 %s307, 1
    %p311 = scmp.eq.s32.totalorder %s21, 1
    %p312 = scmp.ne.s32.totalorder %s307, %s309
    %p313 = scmp.eq.s32.totalorder %s21, 0
    %p314 = por %p312, %p313
    %p315 = scmp.ne.s32.totalorder %s307, %s309
    %p316 = scmp.eq.s32.totalorder %s26, 1
    %p317 = por %p315, %p316
    %p318 = scmp.ne.s32.totalorder %s309, %s310
    %p319 = scmp.eq.s32.totalorder %s26, 0
    %p320 = por %p318, %p319
    %p321 = scmp.ne.s32.totalorder %s309, %s310
    %p322 = scmp.eq.s32.totalorder %s27, 1
    %p323 = por %p321, %p322
    %p325 = scmp.ne.s32.totalorder %s310, %s324
    %p326 = scmp.eq.s32.totalorder %s27, 0
    %p327 = por %p325, %p326
    %s329 = sadd.s32 %s328, 1
    %p332 = scmp.eq.s32.totalorder %s21, 1
    %p333 = scmp.ne.s32.totalorder %s328, %s330
    %p334 = scmp.eq.s32.totalorder %s21, 0
    %p335 = por %p333, %p334
    %p336 = scmp.ne.s32.totalorder %s328, %s330
    %p337 = scmp.eq.s32.totalorder %s26, 1
    %p338 = por %p336, %p337
    %p339 = scmp.ne.s32.totalorder %s330, %s331
    %p340 = scmp.eq.s32.totalorder %s26, 0
    %p341 = por %p339, %p340
    %p342 = scmp.ne.s32.totalorder %s330, %s331
    %p343 = scmp.eq.s32.totalorder %s27, 1
    %p344 = por %p342, %p343
    %p346 = scmp.ne.s32.totalorder %s331, %s345
    %p347 = scmp.eq.s32.totalorder %s27, 0
    %p348 = por %p346, %p347
    %s349 = ssub.s32 %s21, %s28
    %p350 = scmp.eq.s32.totalorder %s349, 0
    %s352 = sadd.s32 %s351, 1
    %s353 = scalar_select %p350, %s351, %s352
    %p356 = pneg %p350
    %p357 = scmp.eq.s32.totalorder %s21, 1
    %p358 = por %p356, %p357
    %p359 = scmp.ne.s32.totalorder %s351, %s354
    %p360 = scmp.eq.s32.totalorder %s21, 0
    %p361 = por %p359, %p360
    %p362 = scmp.ne.s32.totalorder %s351, %s354
    %p363 = scmp.eq.s32.totalorder %s26, 1
    %p364 = por %p362, %p363
    %p365 = scmp.ne.s32.totalorder %s354, %s355
    %p366 = scmp.eq.s32.totalorder %s26, 0
    %p367 = por %p365, %p366
    %p368 = scmp.ne.s32.totalorder %s354, %s355
    %p369 = scmp.eq.s32.totalorder %s27, 1
    %p370 = por %p368, %p369
    %p372 = scmp.ne.s32.totalorder %s355, %s371
    %p373 = scmp.eq.s32.totalorder %s27, 0
    %p374 = por %p372, %p373
    %p375 = scmp.le.s32.totalorder 1, %s21
    %p376 = scmp.lt.s32.totalorder %s21, 3
    %p377 = pnand %p375, %p376
    %p378 = pneg %p377
    // Predicated region
    $region9: #{mlp_forward.1} parent=5 // pred_check
      _
    $region10: #{mlp_forward.1} parent=5 // pred_check_branch
      %380 = sbr.rel (%p377) target = $region12
    $region11: #{mlp_forward.1} parent=5 // pred_region
      %s381 = ssub.s32 %s21, 1
      // Predicated region
      $region13: #{mlp_forward.1} parent=11 // pred_check
        %p382 = pneg %p68
      $region14: #{mlp_forward.1} parent=11 // pred_check_branch
        %384 = sbr.rel (%p382) target = $region16
      $region15: #{mlp_forward.1} parent=11 // pred_region
        _
      $region16: #{mlp_forward.1} parent=11 // pred_fallthru
        _
      // Predicated region
      $region17: #{mlp_forward.1} parent=11 // pred_check
        %p385 = pneg %p89
      $region18: #{mlp_forward.1} parent=11 // pred_check_branch
        %387 = sbr.rel (%p385) target = $region20
      $region19: #{mlp_forward.1} parent=11 // pred_region
        _
      $region20: #{mlp_forward.1} parent=11 // pred_fallthru
        _
      // Predicated region
      $region21: #{mlp_forward.1} parent=11 // pred_check
        %p388 = pneg %p110
      $region22: #{mlp_forward.1} parent=11 // pred_check_branch
        %390 = sbr.rel (%p388) target = $region24
      $region23: #{mlp_forward.1} parent=11 // pred_region
        _
      $region24: #{mlp_forward.1} parent=11 // pred_fallthru
        _
      // Predicated region
      $region25: #{mlp_forward.1} parent=11 // pred_check
        %p391 = pneg %p131
      $region26: #{mlp_forward.1} parent=11 // pred_check_branch
        %393 = sbr.rel (%p391) target = $region28
      $region27: #{mlp_forward.1} parent=11 // pred_region
        _
      $region28: #{mlp_forward.1} parent=11 // pred_fallthru
        _
      // Predicated region
      $region29: #{mlp_forward.1} parent=11 // pred_check
        %p394 = pneg %p152
      $region30: #{mlp_forward.1} parent=11 // pred_check_branch
        %396 = sbr.rel (%p394) target = $region32
      $region31: #{mlp_forward.1} parent=11 // pred_region
        _
      $region32: #{mlp_forward.1} parent=11 // pred_fallthru
        _
      // Predicated region
      $region33: #{mlp_forward.1} parent=11 // pred_check
        %p397 = pneg %p173
      $region34: #{mlp_forward.1} parent=11 // pred_check_branch
        %399 = sbr.rel (%p397) target = $region36
      $region35: #{mlp_forward.1} parent=11 // pred_region
        _
      $region36: #{mlp_forward.1} parent=11 // pred_fallthru
        _
      // Predicated region
      $region37: #{mlp_forward.1} parent=11 // pred_check
        %p400 = pneg %p194
      $region38: #{mlp_forward.1} parent=11 // pred_check_branch
        %402 = sbr.rel (%p400) target = $region40
      $region39: #{mlp_forward.1} parent=11 // pred_region
        _
      $region40: #{mlp_forward.1} parent=11 // pred_fallthru
        _
      // Predicated region
      $region41: #{mlp_forward.1} parent=11 // pred_check
        %p403 = pneg %p215
      $region42: #{mlp_forward.1} parent=11 // pred_check_branch
        %405 = sbr.rel (%p403) target = $region44
      $region43: #{mlp_forward.1} parent=11 // pred_region
        _
      $region44: #{mlp_forward.1} parent=11 // pred_fallthru
        _
      // Predicated region
      $region45: #{mlp_forward.1} parent=11 // pred_check
        %p406 = pneg %p236
      $region46: #{mlp_forward.1} parent=11 // pred_check_branch
        %408 = sbr.rel (%p406) target = $region48
      $region47: #{mlp_forward.1} parent=11 // pred_region
        _
      $region48: #{mlp_forward.1} parent=11 // pred_fallthru
        _
      // Predicated region
      $region49: #{mlp_forward.1} parent=11 // pred_check
        %p409 = pneg %p257
      $region50: #{mlp_forward.1} parent=11 // pred_check_branch
        %411 = sbr.rel (%p409) target = $region52
      $region51: #{mlp_forward.1} parent=11 // pred_region
        _
      $region52: #{mlp_forward.1} parent=11 // pred_fallthru
        _
      // Predicated region
      $region53: #{mlp_forward.1} parent=11 // pred_check
        %p412 = pneg %p278
      $region54: #{mlp_forward.1} parent=11 // pred_check_branch
        %414 = sbr.rel (%p412) target = $region56
      $region55: #{mlp_forward.1} parent=11 // pred_region
        _
      $region56: #{mlp_forward.1} parent=11 // pred_fallthru
        _
      // Predicated region
      $region57: #{mlp_forward.1} parent=11 // pred_check
        %p415 = pneg %p299
      $region58: #{mlp_forward.1} parent=11 // pred_check_branch
        %417 = sbr.rel (%p415) target = $region60
      $region59: #{mlp_forward.1} parent=11 // pred_region
        _
      $region60: #{mlp_forward.1} parent=11 // pred_fallthru
        _
      // Predicated region
      $region61: #{mlp_forward.1} parent=11 // pred_check
        %p418 = pneg %p320
      $region62: #{mlp_forward.1} parent=11 // pred_check_branch
        %420 = sbr.rel (%p418) target = $region64
      $region63: #{mlp_forward.1} parent=11 // pred_region
        _
      $region64: #{mlp_forward.1} parent=11 // pred_fallthru
        _
      // Predicated region
      $region65: #{mlp_forward.1} parent=11 // pred_check
        %p421 = pneg %p341
      $region66: #{mlp_forward.1} parent=11 // pred_check_branch
        %423 = sbr.rel (%p421) target = $region68
      $region67: #{mlp_forward.1} parent=11 // pred_region
        _
      $region68: #{mlp_forward.1} parent=11 // pred_fallthru
        _
    $region12: #{mlp_forward.1} parent=5 // pred_fallthru
      _
    %p424 = scmp.lt.s32.totalorder %s21, 2
    // Predicated region
    $region69: #{mlp_forward.1} parent=5 // pred_check
      %p425 = pneg %p424
    $region70: #{mlp_forward.1} parent=5 // pred_check_branch
      %427 = sbr.rel (%p425) target = $region72
    $region71: #{mlp_forward.1} parent=5 // pred_region
      // Predicated region
      $region73: #{mlp_forward.1} parent=71 // pred_check
        %p428 = pneg %p41
      $region74: #{mlp_forward.1} parent=71 // pred_check_branch
        %430 = sbr.rel (%p428) target = $region76
      $region75: #{mlp_forward.1} parent=71 // pred_region
        %s431 = smul.u32 32, %s21
        %p432 = scmp.lt.s32.totalorder %s431, 63
        %s433 = scalar_select %p432, %s431, 63
        %s434 = smul.addr %s433, 8
        %s435 = scalar_lea.vmem %s0, %s434
        %s436 = smul.u32 32, %s21
      $region76: #{mlp_forward.1} parent=71 // pred_fallthru
        _
    $region72: #{mlp_forward.1} parent=5 // pred_fallthru
      _
    %p437 = scmp.le.s32.totalorder 1, %s21
    %p438 = scmp.lt.s32.totalorder %s21, 3
    %p439 = pnand %p437, %p438
    %p440 = pneg %p439
    // Predicated region
    $region77: #{mlp_forward.1} parent=5 // pred_check
      _
    $region78: #{mlp_forward.1} parent=5 // pred_check_branch
      %442 = sbr.rel (%p439) target = $region80
    $region79: #{mlp_forward.1} parent=5 // pred_region
      %s443 = ssub.s32 %s21, 1
      %s444 = smul.u32 32, %s26
      %p445 = scmp.lt.s32.totalorder %s444, 63
      %s446 = scalar_select %p445, %s444, 63
      %s447 = smul.addr %s446, 8
      %s448 = scalar_lea.vmem %s0, %s447
      %p449 = pneg %p47
      %p450 = pneg %p44
      %p451 = pneg %p68
      %p452 = pneg %p65
      %p453 = pneg %p89
      %p454 = pneg %p86
      %p455 = pneg %p110
      %p456 = pneg %p107
      %p457 = pneg %p131
      %p458 = pneg %p128
      %p459 = pneg %p152
      %p460 = pneg %p149
      %p461 = pneg %p173
      %p462 = pneg %p170
      %p463 = pneg %p194
      %p464 = pneg %p191
      %p465 = pneg %p215
      %p466 = pneg %p212
      %p467 = pneg %p236
      %p468 = pneg %p233
      %p469 = pneg %p257
      %p470 = pneg %p254
      %p471 = pneg %p278
      %p472 = pneg %p275
      %p473 = pneg %p299
      %p474 = pneg %p296
      %p475 = pneg %p320
      %p476 = pneg %p317
      %p477 = pneg %p341
      %p478 = pneg %p338
      %p479 = pneg %p367
      %p480 = pneg %p364
      %s481 = smul.u32 32, %s26
      %p482 = scmp.lt.s32.totalorder %s481, 63
      %s483 = scalar_select %p482, %s481, 63
      %s484 = smul.addr %s483, 8
      %s485 = scalar_lea.vmem %s15, %s484
      %s486 = smul.u32 32, %s26
      %p487 = scmp.lt.s32.totalorder %s486, 63
      %s488 = scalar_select %p487, %s486, 63
      %s489 = smul.addr %s488, 8
      %s490 = scalar_lea.vmem %s0, %s489
      %s491 = smul.u32 32, %s26
      %s492 = smul.u32 32, %s26
      %p493 = scmp.lt.s32.totalorder %s492, 63
      %s494 = scalar_select %p493, %s492, 63
      %s495 = smul.addr %s494, 8
      %s496 = scalar_lea.vmem %s15, %s495
      %s497 = smul.u32 32, %s26
      %v498 = vld [vmem:[%s490] sm:$0xff]
      %v499 = vld [vmem:[%s490 + $0x8] sm:$0xff]
      %v500 = vld [vmem:[%s490 + $0x10] sm:$0xff]
      %v501 = vld [vmem:[%s490 + $0x18] sm:$0xff]
      %v502 = vld [vmem:[%s490 + $0x20] sm:$0xff]
      %v503 = vld [vmem:[%s490 + $0x28] sm:$0xff]
      %v504 = vld [vmem:[%s490 + $0x30] sm:$0xff]
      %v505 = vld [vmem:[%s490 + $0x38] sm:$0xff]
      %v506 = vld [vmem:[%s490 + $0x40] sm:$0xff]
      %v507 = vld [vmem:[%s490 + $0x48] sm:$0xff]
      %v508 = vld [vmem:[%s490 + $0x50] sm:$0xff]
      %v509 = vld [vmem:[%s490 + $0x58] sm:$0xff]
      %v510 = vld [vmem:[%s490 + $0x60] sm:$0xff]
      %v511 = vld [vmem:[%s490 + $0x68] sm:$0xff]
      %v512 = vld [vmem:[%s490 + $0x70] sm:$0xff]
      %v513 = vld [vmem:[%s490 + $0x78] sm:$0xff]
      %v514 = vld [vmem:[%s490 + $0x80] sm:$0xff]
      %v515 = vld [vmem:[%s490 + $0x88] sm:$0xff]
      %v516 = vld [vmem:[%s490 + $0x90] sm:$0xff]
      %v517 = vld [vmem:[%s490 + $0x98] sm:$0xff]
      %v518 = vld [vmem:[%s490 + $0xa0] sm:$0xff]
      %v519 = vld [vmem:[%s490 + $0xa8] sm:$0xff]
      %v520 = vld [vmem:[%s490 + $0xb0] sm:$0xff]
      %v521 = vld [vmem:[%s490 + $0xb8] sm:$0xff]
      %v522 = vld [vmem:[%s490 + $0xc0] sm:$0xff]
      %v523 = vld [vmem:[%s490 + $0xc8] sm:$0xff]
      %v524 = vld [vmem:[%s490 + $0xd0] sm:$0xff]
      %v525 = vld [vmem:[%s490 + $0xd8] sm:$0xff]
      %v526 = vld [vmem:[%s490 + $0xe0] sm:$0xff]
      %v527 = vld [vmem:[%s490 + $0xe8] sm:$0xff]
      %v528 = vld [vmem:[%s490 + $0xf0] sm:$0xff]
      %v529 = vld [vmem:[%s490 + $0xf8] sm:$0xff]
      %v530 = vld [vmem:[%s1] sm:$0xff]
      %v531 = vld [vmem:[%s2] sm:$0x1]
      %v533 = vlaneseq
      %v534 = vshrl.u32 %v533, 7
      %v535 = vsub.s32 0, %v534
      %v536 = vrot.slane %v531, %v535
      %vm538 = vcmask 64512
      %v540 = vsel %vm538, %v498, 0
      %v543 = vsel %vm538, %v499, 0
      %v546 = vsel %vm538, %v500, 0
      %v549 = vsel %vm538, %v501, 0
      %v552 = vsel %vm538, %v502, 0
      %v555 = vsel %vm538, %v503, 0
      %v558 = vsel %vm538, %v504, 0
      %v561 = vsel %vm538, %v505, 0
      %v564 = vsel %vm538, %v506, 0
      %v567 = vsel %vm538, %v507, 0
      %v570 = vsel %vm538, %v508, 0
      %v573 = vsel %vm538, %v509, 0
      %v576 = vsel %vm538, %v510, 0
      %v579 = vsel %vm538, %v511, 0
      %v582 = vsel %vm538, %v512, 0
      %v585 = vsel %vm538, %v513, 0
      %v588 = vsel %vm538, %v514, 0
      %v591 = vsel %vm538, %v515, 0
      %v594 = vsel %vm538, %v516, 0
      %v597 = vsel %vm538, %v517, 0
      %v600 = vsel %vm538, %v518, 0
      %v603 = vsel %vm538, %v519, 0
      %v606 = vsel %vm538, %v520, 0
      %v609 = vsel %vm538, %v521, 0
      %v612 = vsel %vm538, %v522, 0
      %v615 = vsel %vm538, %v523, 0
      %v618 = vsel %vm538, %v524, 0
      %v621 = vsel %vm538, %v525, 0
      %v624 = vsel %vm538, %v526, 0
      %v627 = vsel %vm538, %v527, 0
      %v630 = vsel %vm538, %v528, 0
      %v633 = vsel %vm538, %v529, 0
      %635 = vmatprep.subr.mxu0 0.0
      %636 = vmatpush1.msra.mxu0 %v530
      %637 = vmatprep.subr.mxu0 0.0
      %638 = vmatpush1.msra.mxu0 0.0
      %639 = vmatprep.subr.mxu0 0.0
      %640 = vmatpush1.msra.mxu0 0.0
      %641 = vmatprep.subr.mxu0 0.0
      %642 = vmatpush1.msra.mxu0 0.0
      %643 = vmatprep.subr.mxu0 0.0
      %644 = vmatpush1.msra.mxu0 0.0
      %645 = vmatprep.subr.mxu0 0.0
      %646 = vmatpush1.msra.mxu0 0.0
      %647 = vmatprep.subr.mxu0 0.0
      %648 = vmatpush1.msra.mxu0 0.0
      %649 = vmatprep.subr.mxu0 0.0
      %650 = vmatpush1.msra.mxu0 0.0
      %651 = vmatprep.subr.mxu0 0.0
      %652 = vmatpush1.msra.mxu0 0.0
      %653 = vmatprep.subr.mxu0 0.0
      %654 = vmatpush1.msra.mxu0 0.0
      %655 = vmatprep.subr.mxu0 0.0
      %656 = vmatpush1.msra.mxu0 0.0
      %657 = vmatprep.subr.mxu0 0.0
      %658 = vmatpush1.msra.mxu0 0.0
      %659 = vmatprep.subr.mxu0 0.0
      %660 = vmatpush1.msra.mxu0 0.0
      %661 = vmatprep.subr.mxu0 0.0
      %662 = vmatpush1.msra.mxu0 0.0
      %663 = vmatprep.subr.mxu0 0.0
      %664 = vmatpush1.msra.mxu0 0.0
      %665 = vmatprep.subr.mxu0 0.0
      %666 = vmatpush1.msra.mxu0 0.0
      %667 = vmatprep.subr.mxu0 0.0
      %668 = vmatpush1.msra.mxu0 0.0
      %669 = vmatprep.subr.mxu0 0.0
      %670 = vmatpush1.msra.mxu0 0.0
      %671 = vmatprep.subr.mxu0 0.0
      %672 = vmatpush1.msra.mxu0 0.0
      %673 = vmatprep.subr.mxu0 0.0
      %674 = vmatpush1.msra.mxu0 0.0
      %675 = vmatprep.subr.mxu0 0.0
      %676 = vmatpush1.msra.mxu0 0.0
      %677 = vmatprep.subr.mxu0 0.0
      %678 = vmatpush1.msra.mxu0 0.0
      %679 = vmatprep.subr.mxu0 0.0
      %680 = vmatpush1.msra.mxu0 0.0
      %681 = vmatprep.subr.mxu0 0.0
      %682 = vmatpush1.msra.mxu0 0.0
      %683 = vmatprep.subr.mxu0 0.0
      %684 = vmatpush1.msra.mxu0 0.0
      %685 = vmatprep.subr.mxu0 0.0
      %686 = vmatpush1.msra.mxu0 0.0
      %687 = vmatprep.subr.mxu0 0.0
      %688 = vmatpush1.msra.mxu0 0.0
      %689 = vmatprep.subr.mxu0 0.0
      %690 = vmatpush1.msra.mxu0 0.0
      %691 = vmatprep.subr.mxu0 0.0
      %692 = vmatpush1.msra.mxu0 0.0
      %693 = vmatprep.subr.mxu0 0.0
      %694 = vmatpush1.msra.mxu0 0.0
      %695 = vmatprep.subr.mxu0 0.0
      %696 = vmatpush1.msra.mxu0 0.0
      %697 = vmatprep.subr.mxu0 0.0
      %698 = vmatpush1.msra.mxu0 0.0
      %699 = vmatprep.mubr.f32.mxu0 0.0
      %700 = vmatmul.mubr.f32.gmra.mrb[0].mxu0 %v540
      %v701 = vpop.f32.mrb[0].mxu0
      %v702 = vadd.f32 %v536, %v701
      %v703 = vpop.f32.mrb[0].mxu0
      %704 = vmatprep.mubr.f32.mxu0 0.0
      %705 = vmatmul.mubr.f32.gmra.mrb[0].mxu0 %v543
      %v706 = vpop.f32.mrb[0].mxu0
      %v707 = vadd.f32 %v536, %v706
      %v708 = vpop.f32.mrb[0].mxu0
      %709 = vmatprep.mubr.f32.mxu0 0.0
      %710 = vmatmul.mubr.f32.gmra.mrb[0].mxu0 %v546
      %v711 = vpop.f32.mrb[0].mxu0
      %v712 = vadd.f32 %v536, %v711
      %v713 = vpop.f32.mrb[0].mxu0
      %714 = vmatprep.mubr.f32.mxu0 0.0
      %715 = vmatmul.mubr.f32.gmra.mrb[0].mxu0 %v549
      %v716 = vpop.f32.mrb[0].mxu0
      %v717 = vadd.f32 %v536, %v716
      %v718 = vpop.f32.mrb[0].mxu0
      %719 = vmatprep.mubr.f32.mxu0 0.0
      %720 = vmatmul.mubr.f32.gmra.mrb[0].mxu0 %v552
      %v721 = vpop.f32.mrb[0].mxu0
      %v722 = vadd.f32 %v536, %v721
      %v723 = vpop.f32.mrb[0].mxu0
      %724 = vmatprep.mubr.f32.mxu0 0.0
      %725 = vmatmul.mubr.f32.gmra.mrb[0].mxu0 %v555
      %v726 = vpop.f32.mrb[0].mxu0
      %v727 = vadd.f32 %v536, %v726
      %v728 = vpop.f32.mrb[0].mxu0
      %729 = vmatprep.mubr.f32.mxu0 0.0
      %730 = vmatmul.mubr.f32.gmra.mrb[0].mxu0 %v558
      %v731 = vpop.f32.mrb[0].mxu0
      %v732 = vadd.f32 %v536, %v731
      %v733 = vpop.f32.mrb[0].mxu0
      %734 = vmatprep.mubr.f32.mxu0 0.0
      %735 = vmatmul.mubr.f32.gmra.mrb[0].mxu0 %v561
      %v736 = vpop.f32.mrb[0].mxu0
      %v737 = vadd.f32 %v536, %v736
      %v738 = vpop.f32.mrb[0].mxu0
      %739 = vmatprep.mubr.f32.mxu0 0.0
      %740 = vmatmul.mubr.f32.gmra.mrb[0].mxu0 %v564
      %v741 = vpop.f32.mrb[0].mxu0
      %v742 = vadd.f32 %v536, %v741
      %v743 = vpop.f32.mrb[0].mxu0
      %744 = vmatprep.mubr.f32.mxu0 0.0
      %745 = vmatmul.mubr.f32.gmra.mrb[0].mxu0 %v567
      %v746 = vpop.f32.mrb[0].mxu0
      %v747 = vadd.f32 %v536, %v746
      %v748 = vpop.f32.mrb[0].mxu0
      %749 = vmatprep.mubr.f32.mxu0 0.0
      %750 = vmatmul.mubr.f32.gmra.mrb[0].mxu0 %v570
      %v751 = vpop.f32.mrb[0].mxu0
      %v752 = vadd.f32 %v536, %v751
      %v753 = vpop.f32.mrb[0].mxu0
      %754 = vmatprep.mubr.f32.mxu0 0.0
      %755 = vmatmul.mubr.f32.gmra.mrb[0].mxu0 %v573
      %v756 = vpop.f32.mrb[0].mxu0
      %v757 = vadd.f32 %v536, %v756
      %v758 = vpop.f32.mrb[0].mxu0
      %759 = vmatprep.mubr.f32.mxu0 0.0
      %760 = vmatmul.mubr.f32.gmra.mrb[0].mxu0 %v576
      %v761 = vpop.f32.mrb[0].mxu0
      %v762 = vadd.f32 %v536, %v761
      %v763 = vpop.f32.mrb[0].mxu0
      %764 = vmatprep.mubr.f32.mxu0 0.0
      %765 = vmatmul.mubr.f32.gmra.mrb[0].mxu0 %v579
      %v766 = vpop.f32.mrb[0].mxu0
      %v767 = vadd.f32 %v536, %v766
      %v768 = vpop.f32.mrb[0].mxu0
      %769 = vmatprep.mubr.f32.mxu0 0.0
      %770 = vmatmul.mubr.f32.gmra.mrb[0].mxu0 %v582
      %v771 = vpop.f32.mrb[0].mxu0
      %v772 = vadd.f32 %v536, %v771
      %v773 = vpop.f32.mrb[0].mxu0
      %774 = vmatprep.mubr.f32.mxu0 0.0
      %775 = vmatmul.mubr.f32.gmra.mrb[0].mxu0 %v585
      %v776 = vpop.f32.mrb[0].mxu0
      %v777 = vadd.f32 %v536, %v776
      %v778 = vpop.f32.mrb[0].mxu0
      %779 = vmatprep.mubr.f32.mxu0 0.0
      %780 = vmatmul.mubr.f32.gmra.mrb[0].mxu0 %v588
      %v781 = vpop.f32.mrb[0].mxu0
      %v782 = vadd.f32 %v536, %v781
      %v783 = vpop.f32.mrb[0].mxu0
      %784 = vmatprep.mubr.f32.mxu0 0.0
      %785 = vmatmul.mubr.f32.gmra.mrb[0].mxu0 %v591
      %v786 = vpop.f32.mrb[0].mxu0
      %v787 = vadd.f32 %v536, %v786
      %v788 = vpop.f32.mrb[0].mxu0
      %789 = vmatprep.mubr.f32.mxu0 0.0
      %790 = vmatmul.mubr.f32.gmra.mrb[0].mxu0 %v594
      %v791 = vpop.f32.mrb[0].mxu0
      %v792 = vadd.f32 %v536, %v791
      %v793 = vpop.f32.mrb[0].mxu0
      %794 = vmatprep.mubr.f32.mxu0 0.0
      %795 = vmatmul.mubr.f32.gmra.mrb[0].mxu0 %v597
      %v796 = vpop.f32.mrb[0].mxu0
      %v797 = vadd.f32 %v536, %v796
      %v798 = vpop.f32.mrb[0].mxu0
      %799 = vmatprep.mubr.f32.mxu0 0.0
      %800 = vmatmul.mubr.f32.gmra.mrb[0].mxu0 %v600
      %v801 = vpop.f32.mrb[0].mxu0
      %v802 = vadd.f32 %v536, %v801
      %v803 = vpop.f32.mrb[0].mxu0
      %804 = vmatprep.mubr.f32.mxu0 0.0
      %805 = vmatmul.mubr.f32.gmra.mrb[0].mxu0 %v603
      %v806 = vpop.f32.mrb[0].mxu0
      %v807 = vadd.f32 %v536, %v806
      %v808 = vpop.f32.mrb[0].mxu0
      %809 = vmatprep.mubr.f32.mxu0 0.0
      %810 = vmatmul.mubr.f32.gmra.mrb[0].mxu0 %v606
      %v811 = vpop.f32.mrb[0].mxu0
      %v812 = vadd.f32 %v536, %v811
      %v813 = vpop.f32.mrb[0].mxu0
      %814 = vmatprep.mubr.f32.mxu0 0.0
      %815 = vmatmul.mubr.f32.gmra.mrb[0].mxu0 %v609
      %v816 = vpop.f32.mrb[0].mxu0
      %v817 = vadd.f32 %v536, %v816
      %v818 = vpop.f32.mrb[0].mxu0
      %819 = vmatprep.mubr.f32.mxu0 0.0
      %820 = vmatmul.mubr.f32.gmra.mrb[0].mxu0 %v612
      %v821 = vpop.f32.mrb[0].mxu0
      %v822 = vadd.f32 %v536, %v821
      %v823 = vpop.f32.mrb[0].mxu0
      %824 = vmatprep.mubr.f32.mxu0 0.0
      %825 = vmatmul.mubr.f32.gmra.mrb[0].mxu0 %v615
      %v826 = vpop.f32.mrb[0].mxu0
      %v827 = vadd.f32 %v536, %v826
      %v828 = vpop.f32.mrb[0].mxu0
      %829 = vmatprep.mubr.f32.mxu0 0.0
      %830 = vmatmul.mubr.f32.gmra.mrb[0].mxu0 %v618
      %v831 = vpop.f32.mrb[0].mxu0
      %v832 = vadd.f32 %v536, %v831
      %v833 = vpop.f32.mrb[0].mxu0
      %834 = vmatprep.mubr.f32.mxu0 0.0
      %835 = vmatmul.mubr.f32.gmra.mrb[0].mxu0 %v621
      %v836 = vpop.f32.mrb[0].mxu0
      %v837 = vadd.f32 %v536, %v836
      %v838 = vpop.f32.mrb[0].mxu0
      %839 = vmatprep.mubr.f32.mxu0 0.0
      %840 = vmatmul.mubr.f32.gmra.mrb[0].mxu0 %v624
      %v841 = vpop.f32.mrb[0].mxu0
      %v842 = vadd.f32 %v536, %v841
      %v843 = vpop.f32.mrb[0].mxu0
      %844 = vmatprep.mubr.f32.mxu0 0.0
      %845 = vmatmul.mubr.f32.gmra.mrb[0].mxu0 %v627
      %v846 = vpop.f32.mrb[0].mxu0
      %v847 = vadd.f32 %v536, %v846
      %v848 = vpop.f32.mrb[0].mxu0
      %849 = vmatprep.mubr.f32.mxu0 0.0
      %850 = vmatmul.mubr.f32.gmra.mrb[0].mxu0 %v630
      %v851 = vpop.f32.mrb[0].mxu0
      %v852 = vadd.f32 %v536, %v851
      %v853 = vpop.f32.mrb[0].mxu0
      %854 = vmatprep.mubr.f32.mxu0 0.0
      %855 = vmatmul.mubr.f32.gmra.mrb[0].mxu0 %v633
      %v856 = vpop.f32.mrb[0].mxu0
      %v857 = vadd.f32 %v536, %v856
      %v858 = vpop.f32.mrb[0].mxu0
      %859 = vdwg.mxu0
      %v860 = vtanh.pop %v702
      %v861 = vtanh.pop %v707
      %v862 = vtanh.pop %v712
      %v863 = vtanh.pop %v717
      %v864 = vtanh.pop %v722
      %v865 = vtanh.pop %v727
      %v866 = vtanh.pop %v732
      %v867 = vtanh.pop %v737
      %v868 = vtanh.pop %v742
      %v869 = vtanh.pop %v747
      %v870 = vtanh.pop %v752
      %v871 = vtanh.pop %v757
      %v872 = vtanh.pop %v762
      %v873 = vtanh.pop %v767
      %v874 = vtanh.pop %v772
      %v875 = vtanh.pop %v777
      %v876 = vtanh.pop %v782
      %v877 = vtanh.pop %v787
      %v878 = vtanh.pop %v792
      %v879 = vtanh.pop %v797
      %v880 = vtanh.pop %v802
      %v881 = vtanh.pop %v807
      %v882 = vtanh.pop %v812
      %v883 = vtanh.pop %v817
      %v884 = vtanh.pop %v822
      %v885 = vtanh.pop %v827
      %v886 = vtanh.pop %v832
      %v887 = vtanh.pop %v837
      %v888 = vtanh.pop %v842
      %v889 = vtanh.pop %v847
      %v890 = vtanh.pop %v852
      %v891 = vtanh.pop %v857
      %v892 = vld [vmem:[%s3] sm:$0xff]
      %v893 = vld [vmem:[%s3 + $0x8] sm:$0xff]
      %v894 = vld [vmem:[%s3 + $0x10] sm:$0xff]
      %v895 = vld [vmem:[%s3 + $0x18] sm:$0xff]
      %v896 = vld [vmem:[%s3 + $0x20] sm:$0xff]
      %v897 = vld [vmem:[%s3 + $0x28] sm:$0xff]
      %v898 = vld [vmem:[%s3 + $0x30] sm:$0xff]
      %v899 = vld [vmem:[%s3 + $0x38] sm:$0xff]
      %v900 = vld [vmem:[%s3 + $0x40] sm:$0xff]
      %v901 = vld [vmem:[%s3 + $0x48] sm:$0xff]
      %v902 = vld [vmem:[%s3 + $0x50] sm:$0xff]
      %v903 = vld [vmem:[%s3 + $0x58] sm:$0xff]
      %v904 = vld [vmem:[%s3 + $0x60] sm:$0xff]
      %v905 = vld [vmem:[%s3 + $0x68] sm:$0xff]
      %v906 = vld [vmem:[%s3 + $0x70] sm:$0xff]
      %v907 = vld [vmem:[%s3 + $0x78] sm:$0xff]
      %v908 = vld [vmem:[%s4] sm:$0x1]
      %v910 = vlaneseq
      %v911 = vshrl.u32 %v910, 7
      %v912 = vsub.s32 0, %v911
      %v913 = vrot.slane %v908, %v912
      %915 = vmatprep.subr.mxu0 0.0
      %916 = vmatpush1.msra.mxu0 %v892
      %917 = vmatprep.subr.mxu0 0.0
      %918 = vmatpush1.msra.mxu0 %v893
      %919 = vmatprep.subr.mxu0 0.0
      %920 = vmatpush1.msra.mxu0 %v894
      %921 = vmatprep.subr.mxu0 0.0
      %922 = vmatpush1.msra.mxu0 %v895
      %923 = vmatprep.subr.mxu0 0.0
      %924 = vmatpush1.msra.mxu0 %v896
      %925 = vmatprep.subr.mxu0 0.0
      %926 = vmatpush1.msra.mxu0 %v897
      %927 = vmatprep.subr.mxu0 0.0
      %928 = vmatpush1.msra.mxu0 %v898
      %929 = vmatprep.subr.mxu0 0.0
      %930 = vmatpush1.msra.mxu0 %v899
      %931 = vmatprep.subr.mxu0 0.0
      %932 = vmatpush1.msra.mxu0 %v900
      %933 = vmatprep.subr.mxu0 0.0
      %934 = vmatpush1.msra.mxu0 %v901
      %935 = vmatprep.subr.mxu0 0.0
      %936 = vmatpush1.msra.mxu0 %v902
      %937 = vmatprep.subr.mxu0 0.0
      %938 = vmatpush1.msra.mxu0 %v903
      %939 = vmatprep.subr.mxu0 0.0
      %940 = vmatpush1.msra.mxu0 %v904
      %941 = vmatprep.subr.mxu0 0.0
      %942 = vmatpush1.msra.mxu0 %v905
      %943 = vmatprep.subr.mxu0 0.0
      %944 = vmatpush1.msra.mxu0 %v906
      %945 = vmatprep.subr.mxu0 0.0
      %946 = vmatpush1.msra.mxu0 %v907
      %947 = vmatprep.subr.mxu0 0.0
      %948 = vmatpush1.msra.mxu0 0.0
      %949 = vmatprep.subr.mxu0 0.0
      %950 = vmatpush1.msra.mxu0 0.0
      %951 = vmatprep.subr.mxu0 0.0
      %952 = vmatpush1.msra.mxu0 0.0
      %953 = vmatprep.subr.mxu0 0.0
      %954 = vmatpush1.msra.mxu0 0.0
      %955 = vmatprep.subr.mxu0 0.0
      %956 = vmatpush1.msra.mxu0 0.0
      %957 = vmatprep.subr.mxu0 0.0
      %958 = vmatpush1.msra.mxu0 0.0
      %959 = vmatprep.subr.mxu0 0.0
      %960 = vmatpush1.msra.mxu0 0.0
      %961 = vmatprep.subr.mxu0 0.0
      %962 = vmatpush1.msra.mxu0 0.0
      %963 = vmatprep.subr.mxu0 0.0
      %964 = vmatpush1.msra.mxu0 0.0
      %965 = vmatprep.subr.mxu0 0.0
      %966 = vmatpush1.msra.mxu0 0.0
      %967 = vmatprep.subr.mxu0 0.0
      %968 = vmatpush1.msra.mxu0 0.0
      %969 = vmatprep.subr.mxu0 0.0
      %970 = vmatpush1.msra.mxu0 0.0
      %971 = vmatprep.subr.mxu0 0.0
      %972 = vmatpush1.msra.mxu0 0.0
      %973 = vmatprep.subr.mxu0 0.0
      %974 = vmatpush1.msra.mxu0 0.0
      %975 = vmatprep.subr.mxu0 0.0
      %976 = vmatpush1.msra.mxu0 0.0
      %977 = vmatprep.subr.mxu0 0.0
      %978 = vmatpush1.msra.mxu0 0.0
      %979 = vmatprep.mubr.f32.mxu0 0.0
      %980 = vmatmul.mubr.f32.gmra.mrb[0].mxu0 %v860
      %v981 = vpop.f32.mrb[0].mxu0
      %v982 = vadd.f32 %v913, %v981
      %v983 = vpop.f32.mrb[0].mxu0
      %984 = vmatprep.mubr.f32.mxu0 0.0
      %985 = vmatmul.mubr.f32.gmra.mrb[0].mxu0 %v861
      %v986 = vpop.f32.mrb[0].mxu0
      %v987 = vadd.f32 %v913, %v986
      %v988 = vpop.f32.mrb[0].mxu0
      %989 = vmatprep.mubr.f32.mxu0 0.0
      %990 = vmatmul.mubr.f32.gmra.mrb[0].mxu0 %v862
      %v991 = vpop.f32.mrb[0].mxu0
      %v992 = vadd.f32 %v913, %v991
      %v993 = vpop.f32.mrb[0].mxu0
      %994 = vmatprep.mubr.f32.mxu0 0.0
      %995 = vmatmul.mubr.f32.gmra.mrb[0].mxu0 %v863
      %v996 = vpop.f32.mrb[0].mxu0
      %v997 = vadd.f32 %v913, %v996
      %v998 = vpop.f32.mrb[0].mxu0
      %999 = vmatprep.mubr.f32.mxu0 0.0
      %1000 = vmatmul.mubr.f32.gmra.mrb[0].mxu0 %v864
      %v1001 = vpop.f32.mrb[0].mxu0
      %v1002 = vadd.f32 %v913, %v1001
      %v1003 = vpop.f32.mrb[0].mxu0
      %1004 = vmatprep.mubr.f32.mxu0 0.0
      %1005 = vmatmul.mubr.f32.gmra.mrb[0].mxu0 %v865
      %v1006 = vpop.f32.mrb[0].mxu0
      %v1007 = vadd.f32 %v913, %v1006
      %v1008 = vpop.f32.mrb[0].mxu0
      %1009 = vmatprep.mubr.f32.mxu0 0.0
      %1010 = vmatmul.mubr.f32.gmra.mrb[0].mxu0 %v866
      %v1011 = vpop.f32.mrb[0].mxu0
      %v1012 = vadd.f32 %v913, %v1011
      %v1013 = vpop.f32.mrb[0].mxu0
      %1014 = vmatprep.mubr.f32.mxu0 0.0
      %1015 = vmatmul.mubr.f32.gmra.mrb[0].mxu0 %v867
      %v1016 = vpop.f32.mrb[0].mxu0
      %v1017 = vadd.f32 %v913, %v1016
      %v1018 = vpop.f32.mrb[0].mxu0
      %1019 = vmatprep.mubr.f32.mxu0 0.0
      %1020 = vmatmul.mubr.f32.gmra.mrb[0].mxu0 %v868
      %v1021 = vpop.f32.mrb[0].mxu0
      %v1022 = vadd.f32 %v913, %v1021
      %v1023 = vpop.f32.mrb[0].mxu0
      %1024 = vmatprep.mubr.f32.mxu0 0.0
      %1025 = vmatmul.mubr.f32.gmra.mrb[0].mxu0 %v869
      %v1026 = vpop.f32.mrb[0].mxu0
      %v1027 = vadd.f32 %v913, %v1026
      %v1028 = vpop.f32.mrb[0].mxu0
      %1029 = vmatprep.mubr.f32.mxu0 0.0
      %1030 = vmatmul.mubr.f32.gmra.mrb[0].mxu0 %v870
      %v1031 = vpop.f32.mrb[0].mxu0
      %v1032 = vadd.f32 %v913, %v1031
      %v1033 = vpop.f32.mrb[0].mxu0
      %1034 = vmatprep.mubr.f32.mxu0 0.0
      %1035 = vmatmul.mubr.f32.gmra.mrb[0].mxu0 %v871
      %v1036 = vpop.f32.mrb[0].mxu0
      %v1037 = vadd.f32 %v913, %v1036
      %v1038 = vpop.f32.mrb[0].mxu0
      %1039 = vmatprep.mubr.f32.mxu0 0.0
      %1040 = vmatmul.mubr.f32.gmra.mrb[0].mxu0 %v872
      %v1041 = vpop.f32.mrb[0].mxu0
      %v1042 = vadd.f32 %v913, %v1041
      %v1043 = vpop.f32.mrb[0].mxu0
      %1044 = vmatprep.mubr.f32.mxu0 0.0
      %1045 = vmatmul.mubr.f32.gmra.mrb[0].mxu0 %v873
      %v1046 = vpop.f32.mrb[0].mxu0
      %v1047 = vadd.f32 %v913, %v1046
      %v1048 = vpop.f32.mrb[0].mxu0
      %1049 = vmatprep.mubr.f32.mxu0 0.0
      %1050 = vmatmul.mubr.f32.gmra.mrb[0].mxu0 %v874
      %v1051 = vpop.f32.mrb[0].mxu0
      %v1052 = vadd.f32 %v913, %v1051
      %v1053 = vpop.f32.mrb[0].mxu0
      %1054 = vmatprep.mubr.f32.mxu0 0.0
      %1055 = vmatmul.mubr.f32.gmra.mrb[0].mxu0 %v875
      %v1056 = vpop.f32.mrb[0].mxu0
      %v1057 = vadd.f32 %v913, %v1056
      %v1058 = vpop.f32.mrb[0].mxu0
      %1059 = vmatprep.mubr.f32.mxu0 0.0
      %1060 = vmatmul.mubr.f32.gmra.mrb[0].mxu0 %v876
      %v1061 = vpop.f32.mrb[0].mxu0
      %v1062 = vadd.f32 %v913, %v1061
      %v1063 = vpop.f32.mrb[0].mxu0
      %1064 = vmatprep.mubr.f32.mxu0 0.0
      %1065 = vmatmul.mubr.f32.gmra.mrb[0].mxu0 %v877
      %v1066 = vpop.f32.mrb[0].mxu0
      %v1067 = vadd.f32 %v913, %v1066
      %v1068 = vpop.f32.mrb[0].mxu0
      %1069 = vmatprep.mubr.f32.mxu0 0.0
      %1070 = vmatmul.mubr.f32.gmra.mrb[0].mxu0 %v878
      %v1071 = vpop.f32.mrb[0].mxu0
      %v1072 = vadd.f32 %v913, %v1071
      %v1073 = vpop.f32.mrb[0].mxu0
      %1074 = vmatprep.mubr.f32.mxu0 0.0
      %1075 = vmatmul.mubr.f32.gmra.mrb[0].mxu0 %v879
      %v1076 = vpop.f32.mrb[0].mxu0
      %v1077 = vadd.f32 %v913, %v1076
      %v1078 = vpop.f32.mrb[0].mxu0
      %1079 = vmatprep.mubr.f32.mxu0 0.0
      %1080 = vmatmul.mubr.f32.gmra.mrb[0].mxu0 %v880
      %v1081 = vpop.f32.mrb[0].mxu0
      %v1082 = vadd.f32 %v913, %v1081
      %v1083 = vpop.f32.mrb[0].mxu0
      %1084 = vmatprep.mubr.f32.mxu0 0.0
      %1085 = vmatmul.mubr.f32.gmra.mrb[0].mxu0 %v881
      %v1086 = vpop.f32.mrb[0].mxu0
      %v1087 = vadd.f32 %v913, %v1086
      %v1088 = vpop.f32.mrb[0].mxu0
      %1089 = vmatprep.mubr.f32.mxu0 0.0
      %1090 = vmatmul.mubr.f32.gmra.mrb[0].mxu0 %v882
      %v1091 = vpop.f32.mrb[0].mxu0
      %v1092 = vadd.f32 %v913, %v1091
      %v1093 = vpop.f32.mrb[0].mxu0
      %1094 = vmatprep.mubr.f32.mxu0 0.0
      %1095 = vmatmul.mubr.f32.gmra.mrb[0].mxu0 %v883
      %v1096 = vpop.f32.mrb[0].mxu0
      %v1097 = vadd.f32 %v913, %v1096
      %v1098 = vpop.f32.mrb[0].mxu0
      %1099 = vmatprep.mubr.f32.mxu0 0.0
      %1100 = vmatmul.mubr.f32.gmra.mrb[0].mxu0 %v884
      %v1101 = vpop.f32.mrb[0].mxu0
      %v1102 = vadd.f32 %v913, %v1101
      %v1103 = vpop.f32.mrb[0].mxu0
      %1104 = vmatprep.mubr.f32.mxu0 0.0
      %1105 = vmatmul.mubr.f32.gmra.mrb[0].mxu0 %v885
      %v1106 = vpop.f32.mrb[0].mxu0
      %v1107 = vadd.f32 %v913, %v1106
      %v1108 = vpop.f32.mrb[0].mxu0
      %1109 = vmatprep.mubr.f32.mxu0 0.0
      %1110 = vmatmul.mubr.f32.gmra.mrb[0].mxu0 %v886
      %v1111 = vpop.f32.mrb[0].mxu0
      %v1112 = vadd.f32 %v913, %v1111
      %v1113 = vpop.f32.mrb[0].mxu0
      %1114 = vmatprep.mubr.f32.mxu0 0.0
      %1115 = vmatmul.mubr.f32.gmra.mrb[0].mxu0 %v887
      %v1116 = vpop.f32.mrb[0].mxu0
      %v1117 = vadd.f32 %v913, %v1116
      %v1118 = vpop.f32.mrb[0].mxu0
      %1119 = vmatprep.mubr.f32.mxu0 0.0
      %1120 = vmatmul.mubr.f32.gmra.mrb[0].mxu0 %v888
      %v1121 = vpop.f32.mrb[0].mxu0
      %v1122 = vadd.f32 %v913, %v1121
      %v1123 = vpop.f32.mrb[0].mxu0
      %1124 = vmatprep.mubr.f32.mxu0 0.0
      %1125 = vmatmul.mubr.f32.gmra.mrb[0].mxu0 %v889
      %v1126 = vpop.f32.mrb[0].mxu0
      %v1127 = vadd.f32 %v913, %v1126
      %v1128 = vpop.f32.mrb[0].mxu0
      %1129 = vmatprep.mubr.f32.mxu0 0.0
      %1130 = vmatmul.mubr.f32.gmra.mrb[0].mxu0 %v890
      %v1131 = vpop.f32.mrb[0].mxu0
      %v1132 = vadd.f32 %v913, %v1131
      %v1133 = vpop.f32.mrb[0].mxu0
      %1134 = vmatprep.mubr.f32.mxu0 0.0
      %1135 = vmatmul.mubr.f32.gmra.mrb[0].mxu0 %v891
      %v1136 = vpop.f32.mrb[0].mxu0
      %v1137 = vadd.f32 %v913, %v1136
      %v1138 = vpop.f32.mrb[0].mxu0
      %1139 = vdwg.mxu0
      %v1140 = vtanh.pop %v982
      %v1141 = vtanh.pop %v987
      %v1142 = vtanh.pop %v992
      %v1143 = vtanh.pop %v997
      %v1144 = vtanh.pop %v1002
      %v1145 = vtanh.pop %v1007
      %v1146 = vtanh.pop %v1012
      %v1147 = vtanh.pop %v1017
      %v1148 = vtanh.pop %v1022
      %v1149 = vtanh.pop %v1027
      %v1150 = vtanh.pop %v1032
      %v1151 = vtanh.pop %v1037
      %v1152 = vtanh.pop %v1042
      %v1153 = vtanh.pop %v1047
      %v1154 = vtanh.pop %v1052
      %v1155 = vtanh.pop %v1057
      %v1156 = vtanh.pop %v1062
      %v1157 = vtanh.pop %v1067
      %v1158 = vtanh.pop %v1072
      %v1159 = vtanh.pop %v1077
      %v1160 = vtanh.pop %v1082
      %v1161 = vtanh.pop %v1087
      %v1162 = vtanh.pop %v1092
      %v1163 = vtanh.pop %v1097
      %v1164 = vtanh.pop %v1102
      %v1165 = vtanh.pop %v1107
      %v1166 = vtanh.pop %v1112
      %v1167 = vtanh.pop %v1117
      %v1168 = vtanh.pop %v1122
      %v1169 = vtanh.pop %v1127
      %v1170 = vtanh.pop %v1132
      %v1171 = vtanh.pop %v1137
      %v1172 = vld [vmem:[%s5] sm:$0xff]
      %v1173 = vld [vmem:[%s5 + $0x8] sm:$0xff]
      %v1174 = vld [vmem:[%s5 + $0x10] sm:$0xff]
      %v1175 = vld [vmem:[%s5 + $0x18] sm:$0xff]
      %v1176 = vld [vmem:[%s5 + $0x20] sm:$0xff]
      %v1177 = vld [vmem:[%s5 + $0x28] sm:$0xff]
      %v1178 = vld [vmem:[%s5 + $0x30] sm:$0xff]
      %v1179 = vld [vmem:[%s5 + $0x38] sm:$0xff]
      %v1180 = vld [vmem:[%s5 + $0x40] sm:$0xff]
      %v1181 = vld [vmem:[%s5 + $0x48] sm:$0xff]
      %v1182 = vld [vmem:[%s5 + $0x50] sm:$0xff]
      %v1183 = vld [vmem:[%s5 + $0x58] sm:$0xff]
      %v1184 = vld [vmem:[%s5 + $0x60] sm:$0xff]
      %v1185 = vld [vmem:[%s5 + $0x68] sm:$0xff]
      %v1186 = vld [vmem:[%s5 + $0x70] sm:$0xff]
      %v1187 = vld [vmem:[%s5 + $0x78] sm:$0xff]
      %v1188 = vld [vmem:[%s6] sm:$0x1]
      %v1190 = vlaneseq
      %v1191 = vshrl.u32 %v1190, 7
      %v1192 = vsub.s32 0, %v1191
      %v1193 = vrot.slane %v1188, %v1192
      %1195 = vmatprep.subr.mxu0 0.0
      %1196 = vmatpush1.msra.mxu0 %v1172
      %1197 = vmatprep.subr.mxu0 0.0
      %1198 = vmatpush1.msra.mxu0 %v1173
      %1199 = vmatprep.subr.mxu0 0.0
      %1200 = vmatpush1.msra.mxu0 %v1174
      %1201 = vmatprep.subr.mxu0 0.0
      %1202 = vmatpush1.msra.mxu0 %v1175
      %1203 = vmatprep.subr.mxu0 0.0
      %1204 = vmatpush1.msra.mxu0 %v1176
      %1205 = vmatprep.subr.mxu0 0.0
      %1206 = vmatpush1.msra.mxu0 %v1177
      %1207 = vmatprep.subr.mxu0 0.0
      %1208 = vmatpush1.msra.mxu0 %v1178
      %1209 = vmatprep.subr.mxu0 0.0
      %1210 = vmatpush1.msra.mxu0 %v1179
      %1211 = vmatprep.subr.mxu0 0.0
      %1212 = vmatpush1.msra.mxu0 %v1180
      %1213 = vmatprep.subr.mxu0 0.0
      %1214 = vmatpush1.msra.mxu0 %v1181
      %1215 = vmatprep.subr.mxu0 0.0
      %1216 = vmatpush1.msra.mxu0 %v1182
      %1217 = vmatprep.subr.mxu0 0.0
      %1218 = vmatpush1.msra.mxu0 %v1183
      %1219 = vmatprep.subr.mxu0 0.0
      %1220 = vmatpush1.msra.mxu0 %v1184
      %1221 = vmatprep.subr.mxu0 0.0
      %1222 = vmatpush1.msra.mxu0 %v1185
      %1223 = vmatprep.subr.mxu0 0.0
      %1224 = vmatpush1.msra.mxu0 %v1186
      %1225 = vmatprep.subr.mxu0 0.0
      %1226 = vmatpush1.msra.mxu0 %v1187
      %1227 = vmatprep.subr.mxu0 0.0
      %1228 = vmatpush1.msra.mxu0 0.0
      %1229 = vmatprep.subr.mxu0 0.0
      %1230 = vmatpush1.msra.mxu0 0.0
      %1231 = vmatprep.subr.mxu0 0.0
      %1232 = vmatpush1.msra.mxu0 0.0
      %1233 = vmatprep.subr.mxu0 0.0
      %1234 = vmatpush1.msra.mxu0 0.0
      %1235 = vmatprep.subr.mxu0 0.0
      %1236 = vmatpush1.msra.mxu0 0.0
      %1237 = vmatprep.subr.mxu0 0.0
      %1238 = vmatpush1.msra.mxu0 0.0
      %1239 = vmatprep.subr.mxu0 0.0
      %1240 = vmatpush1.msra.mxu0 0.0
      %1241 = vmatprep.subr.mxu0 0.0
      %1242 = vmatpush1.msra.mxu0 0.0
      %1243 = vmatprep.subr.mxu0 0.0
      %1244 = vmatpush1.msra.mxu0 0.0
      %1245 = vmatprep.subr.mxu0 0.0
      %1246 = vmatpush1.msra.mxu0 0.0
      %1247 = vmatprep.subr.mxu0 0.0
      %1248 = vmatpush1.msra.mxu0 0.0
      %1249 = vmatprep.subr.mxu0 0.0
      %1250 = vmatpush1.msra.mxu0 0.0
      %1251 = vmatprep.subr.mxu0 0.0
      %1252 = vmatpush1.msra.mxu0 0.0
      %1253 = vmatprep.subr.mxu0 0.0
      %1254 = vmatpush1.msra.mxu0 0.0
      %1255 = vmatprep.subr.mxu0 0.0
      %1256 = vmatpush1.msra.mxu0 0.0
      %1257 = vmatprep.subr.mxu0 0.0
      %1258 = vmatpush1.msra.mxu0 0.0
      %1259 = vmatprep.mubr.f32.mxu0 0.0
      %1260 = vmatmul.mubr.f32.gmra.mrb[0].mxu0 %v1140
      %v1261 = vpop.f32.mrb[0].mxu0
      %v1262 = vadd.f32 %v1193, %v1261
      %v1263 = vpop.f32.mrb[0].mxu0
      %1264 = vmatprep.mubr.f32.mxu0 0.0
      %1265 = vmatmul.mubr.f32.gmra.mrb[0].mxu0 %v1141
      %v1266 = vpop.f32.mrb[0].mxu0
      %v1267 = vadd.f32 %v1193, %v1266
      %v1268 = vpop.f32.mrb[0].mxu0
      %1269 = vmatprep.mubr.f32.mxu0 0.0
      %1270 = vmatmul.mubr.f32.gmra.mrb[0].mxu0 %v1142
      %v1271 = vpop.f32.mrb[0].mxu0
      %v1272 = vadd.f32 %v1193, %v1271
      %v1273 = vpop.f32.mrb[0].mxu0
      %1274 = vmatprep.mubr.f32.mxu0 0.0
      %1275 = vmatmul.mubr.f32.gmra.mrb[0].mxu0 %v1143
      %v1276 = vpop.f32.mrb[0].mxu0
      %v1277 = vadd.f32 %v1193, %v1276
      %v1278 = vpop.f32.mrb[0].mxu0
      %1279 = vmatprep.mubr.f32.mxu0 0.0
      %1280 = vmatmul.mubr.f32.gmra.mrb[0].mxu0 %v1144
      %v1281 = vpop.f32.mrb[0].mxu0
      %v1282 = vadd.f32 %v1193, %v1281
      %v1283 = vpop.f32.mrb[0].mxu0
      %1284 = vmatprep.mubr.f32.mxu0 0.0
      %1285 = vmatmul.mubr.f32.gmra.mrb[0].mxu0 %v1145
      %v1286 = vpop.f32.mrb[0].mxu0
      %v1287 = vadd.f32 %v1193, %v1286
      %v1288 = vpop.f32.mrb[0].mxu0
      %1289 = vmatprep.mubr.f32.mxu0 0.0
      %1290 = vmatmul.mubr.f32.gmra.mrb[0].mxu0 %v1146
      %v1291 = vpop.f32.mrb[0].mxu0
      %v1292 = vadd.f32 %v1193, %v1291
      %v1293 = vpop.f32.mrb[0].mxu0
      %1294 = vmatprep.mubr.f32.mxu0 0.0
      %1295 = vmatmul.mubr.f32.gmra.mrb[0].mxu0 %v1147
      %v1296 = vpop.f32.mrb[0].mxu0
      %v1297 = vadd.f32 %v1193, %v1296
      %v1298 = vpop.f32.mrb[0].mxu0
      %1299 = vmatprep.mubr.f32.mxu0 0.0
      %1300 = vmatmul.mubr.f32.gmra.mrb[0].mxu0 %v1148
      %v1301 = vpop.f32.mrb[0].mxu0
      %v1302 = vadd.f32 %v1193, %v1301
      %v1303 = vpop.f32.mrb[0].mxu0
      %1304 = vmatprep.mubr.f32.mxu0 0.0
      %1305 = vmatmul.mubr.f32.gmra.mrb[0].mxu0 %v1149
      %v1306 = vpop.f32.mrb[0].mxu0
      %v1307 = vadd.f32 %v1193, %v1306
      %v1308 = vpop.f32.mrb[0].mxu0
      %1309 = vmatprep.mubr.f32.mxu0 0.0
      %1310 = vmatmul.mubr.f32.gmra.mrb[0].mxu0 %v1150
      %v1311 = vpop.f32.mrb[0].mxu0
      %v1312 = vadd.f32 %v1193, %v1311
      %v1313 = vpop.f32.mrb[0].mxu0
      %1314 = vmatprep.mubr.f32.mxu0 0.0
      %1315 = vmatmul.mubr.f32.gmra.mrb[0].mxu0 %v1151
      %v1316 = vpop.f32.mrb[0].mxu0
      %v1317 = vadd.f32 %v1193, %v1316
      %v1318 = vpop.f32.mrb[0].mxu0
      %1319 = vmatprep.mubr.f32.mxu0 0.0
      %1320 = vmatmul.mubr.f32.gmra.mrb[0].mxu0 %v1152
      %v1321 = vpop.f32.mrb[0].mxu0
      %v1322 = vadd.f32 %v1193, %v1321
      %v1323 = vpop.f32.mrb[0].mxu0
      %1324 = vmatprep.mubr.f32.mxu0 0.0
      %1325 = vmatmul.mubr.f32.gmra.mrb[0].mxu0 %v1153
      %v1326 = vpop.f32.mrb[0].mxu0
      %v1327 = vadd.f32 %v1193, %v1326
      %v1328 = vpop.f32.mrb[0].mxu0
      %1329 = vmatprep.mubr.f32.mxu0 0.0
      %1330 = vmatmul.mubr.f32.gmra.mrb[0].mxu0 %v1154
      %v1331 = vpop.f32.mrb[0].mxu0
      %v1332 = vadd.f32 %v1193, %v1331
      %v1333 = vpop.f32.mrb[0].mxu0
      %1334 = vmatprep.mubr.f32.mxu0 0.0
      %1335 = vmatmul.mubr.f32.gmra.mrb[0].mxu0 %v1155
      %v1336 = vpop.f32.mrb[0].mxu0
      %v1337 = vadd.f32 %v1193, %v1336
      %v1338 = vpop.f32.mrb[0].mxu0
      %1339 = vmatprep.mubr.f32.mxu0 0.0
      %1340 = vmatmul.mubr.f32.gmra.mrb[0].mxu0 %v1156
      %v1341 = vpop.f32.mrb[0].mxu0
      %v1342 = vadd.f32 %v1193, %v1341
      %v1343 = vpop.f32.mrb[0].mxu0
      %1344 = vmatprep.mubr.f32.mxu0 0.0
      %1345 = vmatmul.mubr.f32.gmra.mrb[0].mxu0 %v1157
      %v1346 = vpop.f32.mrb[0].mxu0
      %v1347 = vadd.f32 %v1193, %v1346
      %v1348 = vpop.f32.mrb[0].mxu0
      %1349 = vmatprep.mubr.f32.mxu0 0.0
      %1350 = vmatmul.mubr.f32.gmra.mrb[0].mxu0 %v1158
      %v1351 = vpop.f32.mrb[0].mxu0
      %v1352 = vadd.f32 %v1193, %v1351
      %v1353 = vpop.f32.mrb[0].mxu0
      %1354 = vmatprep.mubr.f32.mxu0 0.0
      %1355 = vmatmul.mubr.f32.gmra.mrb[0].mxu0 %v1159
      %v1356 = vpop.f32.mrb[0].mxu0
      %v1357 = vadd.f32 %v1193, %v1356
      %v1358 = vpop.f32.mrb[0].mxu0
      %1359 = vmatprep.mubr.f32.mxu0 0.0
      %1360 = vmatmul.mubr.f32.gmra.mrb[0].mxu0 %v1160
      %v1361 = vpop.f32.mrb[0].mxu0
      %v1362 = vadd.f32 %v1193, %v1361
      %v1363 = vpop.f32.mrb[0].mxu0
      %1364 = vmatprep.mubr.f32.mxu0 0.0
      %1365 = vmatmul.mubr.f32.gmra.mrb[0].mxu0 %v1161
      %v1366 = vpop.f32.mrb[0].mxu0
      %v1367 = vadd.f32 %v1193, %v1366
      %v1368 = vpop.f32.mrb[0].mxu0
      %1369 = vmatprep.mubr.f32.mxu0 0.0
      %1370 = vmatmul.mubr.f32.gmra.mrb[0].mxu0 %v1162
      %v1371 = vpop.f32.mrb[0].mxu0
      %v1372 = vadd.f32 %v1193, %v1371
      %v1373 = vpop.f32.mrb[0].mxu0
      %1374 = vmatprep.mubr.f32.mxu0 0.0
      %1375 = vmatmul.mubr.f32.gmra.mrb[0].mxu0 %v1163
      %v1376 = vpop.f32.mrb[0].mxu0
      %v1377 = vadd.f32 %v1193, %v1376
      %v1378 = vpop.f32.mrb[0].mxu0
      %1379 = vmatprep.mubr.f32.mxu0 0.0
      %1380 = vmatmul.mubr.f32.gmra.mrb[0].mxu0 %v1164
      %v1381 = vpop.f32.mrb[0].mxu0
      %v1382 = vadd.f32 %v1193, %v1381
      %v1383 = vpop.f32.mrb[0].mxu0
      %1384 = vmatprep.mubr.f32.mxu0 0.0
      %1385 = vmatmul.mubr.f32.gmra.mrb[0].mxu0 %v1165
      %v1386 = vpop.f32.mrb[0].mxu0
      %v1387 = vadd.f32 %v1193, %v1386
      %v1388 = vpop.f32.mrb[0].mxu0
      %1389 = vmatprep.mubr.f32.mxu0 0.0
      %1390 = vmatmul.mubr.f32.gmra.mrb[0].mxu0 %v1166
      %v1391 = vpop.f32.mrb[0].mxu0
      %v1392 = vadd.f32 %v1193, %v1391
      %v1393 = vpop.f32.mrb[0].mxu0
      %1394 = vmatprep.mubr.f32.mxu0 0.0
      %1395 = vmatmul.mubr.f32.gmra.mrb[0].mxu0 %v1167
      %v1396 = vpop.f32.mrb[0].mxu0
      %v1397 = vadd.f32 %v1193, %v1396
      %v1398 = vpop.f32.mrb[0].mxu0
      %1399 = vmatprep.mubr.f32.mxu0 0.0
      %1400 = vmatmul.mubr.f32.gmra.mrb[0].mxu0 %v1168
      %v1401 = vpop.f32.mrb[0].mxu0
      %v1402 = vadd.f32 %v1193, %v1401
      %v1403 = vpop.f32.mrb[0].mxu0
      %1404 = vmatprep.mubr.f32.mxu0 0.0
      %1405 = vmatmul.mubr.f32.gmra.mrb[0].mxu0 %v1169
      %v1406 = vpop.f32.mrb[0].mxu0
      %v1407 = vadd.f32 %v1193, %v1406
      %v1408 = vpop.f32.mrb[0].mxu0
      %1409 = vmatprep.mubr.f32.mxu0 0.0
      %1410 = vmatmul.mubr.f32.gmra.mrb[0].mxu0 %v1170
      %v1411 = vpop.f32.mrb[0].mxu0
      %v1412 = vadd.f32 %v1193, %v1411
      %v1413 = vpop.f32.mrb[0].mxu0
      %1414 = vmatprep.mubr.f32.mxu0 0.0
      %1415 = vmatmul.mubr.f32.gmra.mrb[0].mxu0 %v1171
      %v1416 = vpop.f32.mrb[0].mxu0
      %v1417 = vadd.f32 %v1193, %v1416
      %v1418 = vpop.f32.mrb[0].mxu0
      %1419 = vdwg.mxu0
      %v1420 = vtanh.pop %v1262
      %v1421 = vtanh.pop %v1267
      %v1422 = vtanh.pop %v1272
      %v1423 = vtanh.pop %v1277
      %v1424 = vtanh.pop %v1282
      %v1425 = vtanh.pop %v1287
      %v1426 = vtanh.pop %v1292
      %v1427 = vtanh.pop %v1297
      %v1428 = vtanh.pop %v1302
      %v1429 = vtanh.pop %v1307
      %v1430 = vtanh.pop %v1312
      %v1431 = vtanh.pop %v1317
      %v1432 = vtanh.pop %v1322
      %v1433 = vtanh.pop %v1327
      %v1434 = vtanh.pop %v1332
      %v1435 = vtanh.pop %v1337
      %v1436 = vtanh.pop %v1342
      %v1437 = vtanh.pop %v1347
      %v1438 = vtanh.pop %v1352
      %v1439 = vtanh.pop %v1357
      %v1440 = vtanh.pop %v1362
      %v1441 = vtanh.pop %v1367
      %v1442 = vtanh.pop %v1372
      %v1443 = vtanh.pop %v1377
      %v1444 = vtanh.pop %v1382
      %v1445 = vtanh.pop %v1387
      %v1446 = vtanh.pop %v1392
      %v1447 = vtanh.pop %v1397
      %v1448 = vtanh.pop %v1402
      %v1449 = vtanh.pop %v1407
      %v1450 = vtanh.pop %v1412
      %v1451 = vtanh.pop %v1417
      %v1452 = vld [vmem:[%s7] sm:$0xff]
      %v1453 = vld [vmem:[%s7 + $0x8] sm:$0xff]
      %v1454 = vld [vmem:[%s7 + $0x10] sm:$0xff]
      %v1455 = vld [vmem:[%s7 + $0x18] sm:$0xff]
      %v1456 = vld [vmem:[%s7 + $0x20] sm:$0xff]
      %v1457 = vld [vmem:[%s7 + $0x28] sm:$0xff]
      %v1458 = vld [vmem:[%s7 + $0x30] sm:$0xff]
      %v1459 = vld [vmem:[%s7 + $0x38] sm:$0xff]
      %v1460 = vld [vmem:[%s7 + $0x40] sm:$0xff]
      %v1461 = vld [vmem:[%s7 + $0x48] sm:$0xff]
      %v1462 = vld [vmem:[%s7 + $0x50] sm:$0xff]
      %v1463 = vld [vmem:[%s7 + $0x58] sm:$0xff]
      %v1464 = vld [vmem:[%s7 + $0x60] sm:$0xff]
      %v1465 = vld [vmem:[%s7 + $0x68] sm:$0xff]
      %v1466 = vld [vmem:[%s7 + $0x70] sm:$0xff]
      %v1467 = vld [vmem:[%s7 + $0x78] sm:$0xff]
      %v1468 = vld [vmem:[%s8] sm:$0x1]
      %v1470 = vlaneseq
      %v1471 = vshrl.u32 %v1470, 7
      %v1472 = vsub.s32 0, %v1471
      %v1473 = vrot.slane %v1468, %v1472
      %1475 = vmatprep.subr.mxu0 0.0
      %1476 = vmatpush1.msra.mxu0 %v1452
      %1477 = vmatprep.subr.mxu0 0.0
      %1478 = vmatpush1.msra.mxu0 %v1453
      %1479 = vmatprep.subr.mxu0 0.0
      %1480 = vmatpush1.msra.mxu0 %v1454
      %1481 = vmatprep.subr.mxu0 0.0
      %1482 = vmatpush1.msra.mxu0 %v1455
      %1483 = vmatprep.subr.mxu0 0.0
      %1484 = vmatpush1.msra.mxu0 %v1456
      %1485 = vmatprep.subr.mxu0 0.0
      %1486 = vmatpush1.msra.mxu0 %v1457
      %1487 = vmatprep.subr.mxu0 0.0
      %1488 = vmatpush1.msra.mxu0 %v1458
      %1489 = vmatprep.subr.mxu0 0.0
      %1490 = vmatpush1.msra.mxu0 %v1459
      %1491 = vmatprep.subr.mxu0 0.0
      %1492 = vmatpush1.msra.mxu0 %v1460
      %1493 = vmatprep.subr.mxu0 0.0
      %1494 = vmatpush1.msra.mxu0 %v1461
      %1495 = vmatprep.subr.mxu0 0.0
      %1496 = vmatpush1.msra.mxu0 %v1462
      %1497 = vmatprep.subr.mxu0 0.0
      %1498 = vmatpush1.msra.mxu0 %v1463
      %1499 = vmatprep.subr.mxu0 0.0
      %1500 = vmatpush1.msra.mxu0 %v1464
      %1501 = vmatprep.subr.mxu0 0.0
      %1502 = vmatpush1.msra.mxu0 %v1465
      %1503 = vmatprep.subr.mxu0 0.0
      %1504 = vmatpush1.msra.mxu0 %v1466
      %1505 = vmatprep.subr.mxu0 0.0
      %1506 = vmatpush1.msra.mxu0 %v1467
      %1507 = vmatprep.subr.mxu0 0.0
      %1508 = vmatpush1.msra.mxu0 0.0
      %1509 = vmatprep.subr.mxu0 0.0
      %1510 = vmatpush1.msra.mxu0 0.0
      %1511 = vmatprep.subr.mxu0 0.0
      %1512 = vmatpush1.msra.mxu0 0.0
      %1513 = vmatprep.subr.mxu0 0.0
      %1514 = vmatpush1.msra.mxu0 0.0
      %1515 = vmatprep.subr.mxu0 0.0
      %1516 = vmatpush1.msra.mxu0 0.0
      %1517 = vmatprep.subr.mxu0 0.0
      %1518 = vmatpush1.msra.mxu0 0.0
      %1519 = vmatprep.subr.mxu0 0.0
      %1520 = vmatpush1.msra.mxu0 0.0
      %1521 = vmatprep.subr.mxu0 0.0
      %1522 = vmatpush1.msra.mxu0 0.0
      %1523 = vmatprep.subr.mxu0 0.0
      %1524 = vmatpush1.msra.mxu0 0.0
      %1525 = vmatprep.subr.mxu0 0.0
      %1526 = vmatpush1.msra.mxu0 0.0
      %1527 = vmatprep.subr.mxu0 0.0
      %1528 = vmatpush1.msra.mxu0 0.0
      %1529 = vmatprep.subr.mxu0 0.0
      %1530 = vmatpush1.msra.mxu0 0.0
      %1531 = vmatprep.subr.mxu0 0.0
      %1532 = vmatpush1.msra.mxu0 0.0
      %1533 = vmatprep.subr.mxu0 0.0
      %1534 = vmatpush1.msra.mxu0 0.0
      %1535 = vmatprep.subr.mxu0 0.0
      %1536 = vmatpush1.msra.mxu0 0.0
      %1537 = vmatprep.subr.mxu0 0.0
      %1538 = vmatpush1.msra.mxu0 0.0
      %1539 = vmatprep.mubr.f32.mxu0 0.0
      %1540 = vmatmul.mubr.f32.gmra.mrb[0].mxu0 %v1420
      %v1541 = vpop.f32.mrb[0].mxu0
      %v1542 = vadd.f32 %v1473, %v1541
      %v1543 = vpop.f32.mrb[0].mxu0
      %1544 = vmatprep.mubr.f32.mxu0 0.0
      %1545 = vmatmul.mubr.f32.gmra.mrb[0].mxu0 %v1421
      %v1546 = vpop.f32.mrb[0].mxu0
      %v1547 = vadd.f32 %v1473, %v1546
      %v1548 = vpop.f32.mrb[0].mxu0
      %1549 = vmatprep.mubr.f32.mxu0 0.0
      %1550 = vmatmul.mubr.f32.gmra.mrb[0].mxu0 %v1422
      %v1551 = vpop.f32.mrb[0].mxu0
      %v1552 = vadd.f32 %v1473, %v1551
      %v1553 = vpop.f32.mrb[0].mxu0
      %1554 = vmatprep.mubr.f32.mxu0 0.0
      %1555 = vmatmul.mubr.f32.gmra.mrb[0].mxu0 %v1423
      %v1556 = vpop.f32.mrb[0].mxu0
      %v1557 = vadd.f32 %v1473, %v1556
      %v1558 = vpop.f32.mrb[0].mxu0
      %1559 = vmatprep.mubr.f32.mxu0 0.0
      %1560 = vmatmul.mubr.f32.gmra.mrb[0].mxu0 %v1424
      %v1561 = vpop.f32.mrb[0].mxu0
      %v1562 = vadd.f32 %v1473, %v1561
      %v1563 = vpop.f32.mrb[0].mxu0
      %1564 = vmatprep.mubr.f32.mxu0 0.0
      %1565 = vmatmul.mubr.f32.gmra.mrb[0].mxu0 %v1425
      %v1566 = vpop.f32.mrb[0].mxu0
      %v1567 = vadd.f32 %v1473, %v1566
      %v1568 = vpop.f32.mrb[0].mxu0
      %1569 = vmatprep.mubr.f32.mxu0 0.0
      %1570 = vmatmul.mubr.f32.gmra.mrb[0].mxu0 %v1426
      %v1571 = vpop.f32.mrb[0].mxu0
      %v1572 = vadd.f32 %v1473, %v1571
      %v1573 = vpop.f32.mrb[0].mxu0
      %1574 = vmatprep.mubr.f32.mxu0 0.0
      %1575 = vmatmul.mubr.f32.gmra.mrb[0].mxu0 %v1427
      %v1576 = vpop.f32.mrb[0].mxu0
      %v1577 = vadd.f32 %v1473, %v1576
      %v1578 = vpop.f32.mrb[0].mxu0
      %1579 = vmatprep.mubr.f32.mxu0 0.0
      %1580 = vmatmul.mubr.f32.gmra.mrb[0].mxu0 %v1428
      %v1581 = vpop.f32.mrb[0].mxu0
      %v1582 = vadd.f32 %v1473, %v1581
      %v1583 = vpop.f32.mrb[0].mxu0
      %1584 = vmatprep.mubr.f32.mxu0 0.0
      %1585 = vmatmul.mubr.f32.gmra.mrb[0].mxu0 %v1429
      %v1586 = vpop.f32.mrb[0].mxu0
      %v1587 = vadd.f32 %v1473, %v1586
      %v1588 = vpop.f32.mrb[0].mxu0
      %1589 = vmatprep.mubr.f32.mxu0 0.0
      %1590 = vmatmul.mubr.f32.gmra.mrb[0].mxu0 %v1430
      %v1591 = vpop.f32.mrb[0].mxu0
      %v1592 = vadd.f32 %v1473, %v1591
      %v1593 = vpop.f32.mrb[0].mxu0
      %1594 = vmatprep.mubr.f32.mxu0 0.0
      %1595 = vmatmul.mubr.f32.gmra.mrb[0].mxu0 %v1431
      %v1596 = vpop.f32.mrb[0].mxu0
      %v1597 = vadd.f32 %v1473, %v1596
      %v1598 = vpop.f32.mrb[0].mxu0
      %1599 = vmatprep.mubr.f32.mxu0 0.0
      %1600 = vmatmul.mubr.f32.gmra.mrb[0].mxu0 %v1432
      %v1601 = vpop.f32.mrb[0].mxu0
      %v1602 = vadd.f32 %v1473, %v1601
      %v1603 = vpop.f32.mrb[0].mxu0
      %1604 = vmatprep.mubr.f32.mxu0 0.0
      %1605 = vmatmul.mubr.f32.gmra.mrb[0].mxu0 %v1433
      %v1606 = vpop.f32.mrb[0].mxu0
      %v1607 = vadd.f32 %v1473, %v1606
      %v1608 = vpop.f32.mrb[0].mxu0
      %1609 = vmatprep.mubr.f32.mxu0 0.0
      %1610 = vmatmul.mubr.f32.gmra.mrb[0].mxu0 %v1434
      %v1611 = vpop.f32.mrb[0].mxu0
      %v1612 = vadd.f32 %v1473, %v1611
      %v1613 = vpop.f32.mrb[0].mxu0
      %1614 = vmatprep.mubr.f32.mxu0 0.0
      %1615 = vmatmul.mubr.f32.gmra.mrb[0].mxu0 %v1435
      %v1616 = vpop.f32.mrb[0].mxu0
      %v1617 = vadd.f32 %v1473, %v1616
      %v1618 = vpop.f32.mrb[0].mxu0
      %1619 = vmatprep.mubr.f32.mxu0 0.0
      %1620 = vmatmul.mubr.f32.gmra.mrb[0].mxu0 %v1436
      %v1621 = vpop.f32.mrb[0].mxu0
      %v1622 = vadd.f32 %v1473, %v1621
      %v1623 = vpop.f32.mrb[0].mxu0
      %1624 = vmatprep.mubr.f32.mxu0 0.0
      %1625 = vmatmul.mubr.f32.gmra.mrb[0].mxu0 %v1437
      %v1626 = vpop.f32.mrb[0].mxu0
      %v1627 = vadd.f32 %v1473, %v1626
      %v1628 = vpop.f32.mrb[0].mxu0
      %1629 = vmatprep.mubr.f32.mxu0 0.0
      %1630 = vmatmul.mubr.f32.gmra.mrb[0].mxu0 %v1438
      %v1631 = vpop.f32.mrb[0].mxu0
      %v1632 = vadd.f32 %v1473, %v1631
      %v1633 = vpop.f32.mrb[0].mxu0
      %1634 = vmatprep.mubr.f32.mxu0 0.0
      %1635 = vmatmul.mubr.f32.gmra.mrb[0].mxu0 %v1439
      %v1636 = vpop.f32.mrb[0].mxu0
      %v1637 = vadd.f32 %v1473, %v1636
      %v1638 = vpop.f32.mrb[0].mxu0
      %1639 = vmatprep.mubr.f32.mxu0 0.0
      %1640 = vmatmul.mubr.f32.gmra.mrb[0].mxu0 %v1440
      %v1641 = vpop.f32.mrb[0].mxu0
      %v1642 = vadd.f32 %v1473, %v1641
      %v1643 = vpop.f32.mrb[0].mxu0
      %1644 = vmatprep.mubr.f32.mxu0 0.0
      %1645 = vmatmul.mubr.f32.gmra.mrb[0].mxu0 %v1441
      %v1646 = vpop.f32.mrb[0].mxu0
      %v1647 = vadd.f32 %v1473, %v1646
      %v1648 = vpop.f32.mrb[0].mxu0
      %1649 = vmatprep.mubr.f32.mxu0 0.0
      %1650 = vmatmul.mubr.f32.gmra.mrb[0].mxu0 %v1442
      %v1651 = vpop.f32.mrb[0].mxu0
      %v1652 = vadd.f32 %v1473, %v1651
      %v1653 = vpop.f32.mrb[0].mxu0
      %1654 = vmatprep.mubr.f32.mxu0 0.0
      %1655 = vmatmul.mubr.f32.gmra.mrb[0].mxu0 %v1443
      %v1656 = vpop.f32.mrb[0].mxu0
      %v1657 = vadd.f32 %v1473, %v1656
      %v1658 = vpop.f32.mrb[0].mxu0
      %1659 = vmatprep.mubr.f32.mxu0 0.0
      %1660 = vmatmul.mubr.f32.gmra.mrb[0].mxu0 %v1444
      %v1661 = vpop.f32.mrb[0].mxu0
      %v1662 = vadd.f32 %v1473, %v1661
      %v1663 = vpop.f32.mrb[0].mxu0
      %1664 = vmatprep.mubr.f32.mxu0 0.0
      %1665 = vmatmul.mubr.f32.gmra.mrb[0].mxu0 %v1445
      %v1666 = vpop.f32.mrb[0].mxu0
      %v1667 = vadd.f32 %v1473, %v1666
      %v1668 = vpop.f32.mrb[0].mxu0
      %1669 = vmatprep.mubr.f32.mxu0 0.0
      %1670 = vmatmul.mubr.f32.gmra.mrb[0].mxu0 %v1446
      %v1671 = vpop.f32.mrb[0].mxu0
      %v1672 = vadd.f32 %v1473, %v1671
      %v1673 = vpop.f32.mrb[0].mxu0
      %1674 = vmatprep.mubr.f32.mxu0 0.0
      %1675 = vmatmul.mubr.f32.gmra.mrb[0].mxu0 %v1447
      %v1676 = vpop.f32.mrb[0].mxu0
      %v1677 = vadd.f32 %v1473, %v1676
      %v1678 = vpop.f32.mrb[0].mxu0
      %1679 = vmatprep.mubr.f32.mxu0 0.0
      %1680 = vmatmul.mubr.f32.gmra.mrb[0].mxu0 %v1448
      %v1681 = vpop.f32.mrb[0].mxu0
      %v1682 = vadd.f32 %v1473, %v1681
      %v1683 = vpop.f32.mrb[0].mxu0
      %1684 = vmatprep.mubr.f32.mxu0 0.0
      %1685 = vmatmul.mubr.f32.gmra.mrb[0].mxu0 %v1449
      %v1686 = vpop.f32.mrb[0].mxu0
      %v1687 = vadd.f32 %v1473, %v1686
      %v1688 = vpop.f32.mrb[0].mxu0
      %1689 = vmatprep.mubr.f32.mxu0 0.0
      %1690 = vmatmul.mubr.f32.gmra.mrb[0].mxu0 %v1450
      %v1691 = vpop.f32.mrb[0].mxu0
      %v1692 = vadd.f32 %v1473, %v1691
      %v1693 = vpop.f32.mrb[0].mxu0
      %1694 = vmatprep.mubr.f32.mxu0 0.0
      %1695 = vmatmul.mubr.f32.gmra.mrb[0].mxu0 %v1451
      %v1696 = vpop.f32.mrb[0].mxu0
      %v1697 = vadd.f32 %v1473, %v1696
      %v1698 = vpop.f32.mrb[0].mxu0
      %1699 = vdwg.mxu0
      %v1700 = vtanh.pop %v1542
      %v1701 = vtanh.pop %v1547
      %v1702 = vtanh.pop %v1552
      %v1703 = vtanh.pop %v1557
      %v1704 = vtanh.pop %v1562
      %v1705 = vtanh.pop %v1567
      %v1706 = vtanh.pop %v1572
      %v1707 = vtanh.pop %v1577
      %v1708 = vtanh.pop %v1582
      %v1709 = vtanh.pop %v1587
      %v1710 = vtanh.pop %v1592
      %v1711 = vtanh.pop %v1597
      %v1712 = vtanh.pop %v1602
      %v1713 = vtanh.pop %v1607
      %v1714 = vtanh.pop %v1612
      %v1715 = vtanh.pop %v1617
      %v1716 = vtanh.pop %v1622
      %v1717 = vtanh.pop %v1627
      %v1718 = vtanh.pop %v1632
      %v1719 = vtanh.pop %v1637
      %v1720 = vtanh.pop %v1642
      %v1721 = vtanh.pop %v1647
      %v1722 = vtanh.pop %v1652
      %v1723 = vtanh.pop %v1657
      %v1724 = vtanh.pop %v1662
      %v1725 = vtanh.pop %v1667
      %v1726 = vtanh.pop %v1672
      %v1727 = vtanh.pop %v1677
      %v1728 = vtanh.pop %v1682
      %v1729 = vtanh.pop %v1687
      %v1730 = vtanh.pop %v1692
      %v1731 = vtanh.pop %v1697
      %v1732 = vld [vmem:[%s9] sm:$0xff]
      %v1733 = vld [vmem:[%s9 + $0x8] sm:$0xff]
      %v1734 = vld [vmem:[%s9 + $0x10] sm:$0xff]
      %v1735 = vld [vmem:[%s9 + $0x18] sm:$0xff]
      %v1736 = vld [vmem:[%s9 + $0x20] sm:$0xff]
      %v1737 = vld [vmem:[%s9 + $0x28] sm:$0xff]
      %v1738 = vld [vmem:[%s9 + $0x30] sm:$0xff]
      %v1739 = vld [vmem:[%s9 + $0x38] sm:$0xff]
      %v1740 = vld [vmem:[%s9 + $0x40] sm:$0xff]
      %v1741 = vld [vmem:[%s9 + $0x48] sm:$0xff]
      %v1742 = vld [vmem:[%s9 + $0x50] sm:$0xff]
      %v1743 = vld [vmem:[%s9 + $0x58] sm:$0xff]
      %v1744 = vld [vmem:[%s9 + $0x60] sm:$0xff]
      %v1745 = vld [vmem:[%s9 + $0x68] sm:$0xff]
      %v1746 = vld [vmem:[%s9 + $0x70] sm:$0xff]
      %v1747 = vld [vmem:[%s9 + $0x78] sm:$0xff]
      %v1748 = vld [vmem:[%s10] sm:$0x1]
      %v1750 = vlaneseq
      %v1751 = vshrl.u32 %v1750, 7
      %v1752 = vsub.s32 0, %v1751
      %v1753 = vrot.slane %v1748, %v1752
      %1755 = vmatprep.subr.mxu0 0.0
      %1756 = vmatpush1.msra.mxu0 %v1732
      %1757 = vmatprep.subr.mxu0 0.0
      %1758 = vmatpush1.msra.mxu0 %v1733
      %1759 = vmatprep.subr.mxu0 0.0
      %1760 = vmatpush1.msra.mxu0 %v1734
      %1761 = vmatprep.subr.mxu0 0.0
      %1762 = vmatpush1.msra.mxu0 %v1735
      %1763 = vmatprep.subr.mxu0 0.0
      %1764 = vmatpush1.msra.mxu0 %v1736
      %1765 = vmatprep.subr.mxu0 0.0
      %1766 = vmatpush1.msra.mxu0 %v1737
      %1767 = vmatprep.subr.mxu0 0.0
      %1768 = vmatpush1.msra.mxu0 %v1738
      %1769 = vmatprep.subr.mxu0 0.0
      %1770 = vmatpush1.msra.mxu0 %v1739
      %1771 = vmatprep.subr.mxu0 0.0
      %1772 = vmatpush1.msra.mxu0 %v1740
      %1773 = vmatprep.subr.mxu0 0.0
      %1774 = vmatpush1.msra.mxu0 %v1741
      %1775 = vmatprep.subr.mxu0 0.0
      %1776 = vmatpush1.msra.mxu0 %v1742
      %1777 = vmatprep.subr.mxu0 0.0
      %1778 = vmatpush1.msra.mxu0 %v1743
      %1779 = vmatprep.subr.mxu0 0.0
      %1780 = vmatpush1.msra.mxu0 %v1744
      %1781 = vmatprep.subr.mxu0 0.0
      %1782 = vmatpush1.msra.mxu0 %v1745
      %1783 = vmatprep.subr.mxu0 0.0
      %1784 = vmatpush1.msra.mxu0 %v1746
      %1785 = vmatprep.subr.mxu0 0.0
      %1786 = vmatpush1.msra.mxu0 %v1747
      %1787 = vmatprep.subr.mxu0 0.0
      %1788 = vmatpush1.msra.mxu0 0.0
      %1789 = vmatprep.subr.mxu0 0.0
      %1790 = vmatpush1.msra.mxu0 0.0
      %1791 = vmatprep.subr.mxu0 0.0
      %1792 = vmatpush1.msra.mxu0 0.0
      %1793 = vmatprep.subr.mxu0 0.0
      %1794 = vmatpush1.msra.mxu0 0.0
      %1795 = vmatprep.subr.mxu0 0.0
      %1796 = vmatpush1.msra.mxu0 0.0
      %1797 = vmatprep.subr.mxu0 0.0
      %1798 = vmatpush1.msra.mxu0 0.0
      %1799 = vmatprep.subr.mxu0 0.0
      %1800 = vmatpush1.msra.mxu0 0.0
      %1801 = vmatprep.subr.mxu0 0.0
      %1802 = vmatpush1.msra.mxu0 0.0
      %1803 = vmatprep.subr.mxu0 0.0
      %1804 = vmatpush1.msra.mxu0 0.0
      %1805 = vmatprep.subr.mxu0 0.0
      %1806 = vmatpush1.msra.mxu0 0.0
      %1807 = vmatprep.subr.mxu0 0.0
      %1808 = vmatpush1.msra.mxu0 0.0
      %1809 = vmatprep.subr.mxu0 0.0
      %1810 = vmatpush1.msra.mxu0 0.0
      %1811 = vmatprep.subr.mxu0 0.0
      %1812 = vmatpush1.msra.mxu0 0.0
      %1813 = vmatprep.subr.mxu0 0.0
      %1814 = vmatpush1.msra.mxu0 0.0
      %1815 = vmatprep.subr.mxu0 0.0
      %1816 = vmatpush1.msra.mxu0 0.0
      %1817 = vmatprep.subr.mxu0 0.0
      %1818 = vmatpush1.msra.mxu0 0.0
      %1819 = vmatprep.mubr.f32.mxu0 0.0
      %1820 = vmatmul.mubr.f32.gmra.mrb[0].mxu0 %v1700
      %v1821 = vpop.f32.mrb[0].mxu0
      %v1822 = vadd.f32 %v1753, %v1821
      %v1823 = vpop.f32.mrb[0].mxu0
      %1824 = vmatprep.mubr.f32.mxu0 0.0
      %1825 = vmatmul.mubr.f32.gmra.mrb[0].mxu0 %v1701
      %v1826 = vpop.f32.mrb[0].mxu0
      %v1827 = vadd.f32 %v1753, %v1826
      %v1828 = vpop.f32.mrb[0].mxu0
      %1829 = vmatprep.mubr.f32.mxu0 0.0
      %1830 = vmatmul.mubr.f32.gmra.mrb[0].mxu0 %v1702
      %v1831 = vpop.f32.mrb[0].mxu0
      %v1832 = vadd.f32 %v1753, %v1831
      %v1833 = vpop.f32.mrb[0].mxu0
      %1834 = vmatprep.mubr.f32.mxu0 0.0
      %1835 = vmatmul.mubr.f32.gmra.mrb[0].mxu0 %v1703
      %v1836 = vpop.f32.mrb[0].mxu0
      %v1837 = vadd.f32 %v1753, %v1836
      %v1838 = vpop.f32.mrb[0].mxu0
      %1839 = vmatprep.mubr.f32.mxu0 0.0
      %1840 = vmatmul.mubr.f32.gmra.mrb[0].mxu0 %v1704
      %v1841 = vpop.f32.mrb[0].mxu0
      %v1842 = vadd.f32 %v1753, %v1841
      %v1843 = vpop.f32.mrb[0].mxu0
      %1844 = vmatprep.mubr.f32.mxu0 0.0
      %1845 = vmatmul.mubr.f32.gmra.mrb[0].mxu0 %v1705
      %v1846 = vpop.f32.mrb[0].mxu0
      %v1847 = vadd.f32 %v1753, %v1846
      %v1848 = vpop.f32.mrb[0].mxu0
      %1849 = vmatprep.mubr.f32.mxu0 0.0
      %1850 = vmatmul.mubr.f32.gmra.mrb[0].mxu0 %v1706
      %v1851 = vpop.f32.mrb[0].mxu0
      %v1852 = vadd.f32 %v1753, %v1851
      %v1853 = vpop.f32.mrb[0].mxu0
      %1854 = vmatprep.mubr.f32.mxu0 0.0
      %1855 = vmatmul.mubr.f32.gmra.mrb[0].mxu0 %v1707
      %v1856 = vpop.f32.mrb[0].mxu0
      %v1857 = vadd.f32 %v1753, %v1856
      %v1858 = vpop.f32.mrb[0].mxu0
      %1859 = vmatprep.mubr.f32.mxu0 0.0
      %1860 = vmatmul.mubr.f32.gmra.mrb[0].mxu0 %v1708
      %v1861 = vpop.f32.mrb[0].mxu0
      %v1862 = vadd.f32 %v1753, %v1861
      %v1863 = vpop.f32.mrb[0].mxu0
      %1864 = vmatprep.mubr.f32.mxu0 0.0
      %1865 = vmatmul.mubr.f32.gmra.mrb[0].mxu0 %v1709
      %v1866 = vpop.f32.mrb[0].mxu0
      %v1867 = vadd.f32 %v1753, %v1866
      %v1868 = vpop.f32.mrb[0].mxu0
      %1869 = vmatprep.mubr.f32.mxu0 0.0
      %1870 = vmatmul.mubr.f32.gmra.mrb[0].mxu0 %v1710
      %v1871 = vpop.f32.mrb[0].mxu0
      %v1872 = vadd.f32 %v1753, %v1871
      %v1873 = vpop.f32.mrb[0].mxu0
      %1874 = vmatprep.mubr.f32.mxu0 0.0
      %1875 = vmatmul.mubr.f32.gmra.mrb[0].mxu0 %v1711
      %v1876 = vpop.f32.mrb[0].mxu0
      %v1877 = vadd.f32 %v1753, %v1876
      %v1878 = vpop.f32.mrb[0].mxu0
      %1879 = vmatprep.mubr.f32.mxu0 0.0
      %1880 = vmatmul.mubr.f32.gmra.mrb[0].mxu0 %v1712
      %v1881 = vpop.f32.mrb[0].mxu0
      %v1882 = vadd.f32 %v1753, %v1881
      %v1883 = vpop.f32.mrb[0].mxu0
      %1884 = vmatprep.mubr.f32.mxu0 0.0
      %1885 = vmatmul.mubr.f32.gmra.mrb[0].mxu0 %v1713
      %v1886 = vpop.f32.mrb[0].mxu0
      %v1887 = vadd.f32 %v1753, %v1886
      %v1888 = vpop.f32.mrb[0].mxu0
      %1889 = vmatprep.mubr.f32.mxu0 0.0
      %1890 = vmatmul.mubr.f32.gmra.mrb[0].mxu0 %v1714
      %v1891 = vpop.f32.mrb[0].mxu0
      %v1892 = vadd.f32 %v1753, %v1891
      %v1893 = vpop.f32.mrb[0].mxu0
      %1894 = vmatprep.mubr.f32.mxu0 0.0
      %1895 = vmatmul.mubr.f32.gmra.mrb[0].mxu0 %v1715
      %v1896 = vpop.f32.mrb[0].mxu0
      %v1897 = vadd.f32 %v1753, %v1896
      %v1898 = vpop.f32.mrb[0].mxu0
      %1899 = vmatprep.mubr.f32.mxu0 0.0
      %1900 = vmatmul.mubr.f32.gmra.mrb[0].mxu0 %v1716
      %v1901 = vpop.f32.mrb[0].mxu0
      %v1902 = vadd.f32 %v1753, %v1901
      %v1903 = vpop.f32.mrb[0].mxu0
      %1904 = vmatprep.mubr.f32.mxu0 0.0
      %1905 = vmatmul.mubr.f32.gmra.mrb[0].mxu0 %v1717
      %v1906 = vpop.f32.mrb[0].mxu0
      %v1907 = vadd.f32 %v1753, %v1906
      %v1908 = vpop.f32.mrb[0].mxu0
      %1909 = vmatprep.mubr.f32.mxu0 0.0
      %1910 = vmatmul.mubr.f32.gmra.mrb[0].mxu0 %v1718
      %v1911 = vpop.f32.mrb[0].mxu0
      %v1912 = vadd.f32 %v1753, %v1911
      %v1913 = vpop.f32.mrb[0].mxu0
      %1914 = vmatprep.mubr.f32.mxu0 0.0
      %1915 = vmatmul.mubr.f32.gmra.mrb[0].mxu0 %v1719
      %v1916 = vpop.f32.mrb[0].mxu0
      %v1917 = vadd.f32 %v1753, %v1916
      %v1918 = vpop.f32.mrb[0].mxu0
      %1919 = vmatprep.mubr.f32.mxu0 0.0
      %1920 = vmatmul.mubr.f32.gmra.mrb[0].mxu0 %v1720
      %v1921 = vpop.f32.mrb[0].mxu0
      %v1922 = vadd.f32 %v1753, %v1921
      %v1923 = vpop.f32.mrb[0].mxu0
      %1924 = vmatprep.mubr.f32.mxu0 0.0
      %1925 = vmatmul.mubr.f32.gmra.mrb[0].mxu0 %v1721
      %v1926 = vpop.f32.mrb[0].mxu0
      %v1927 = vadd.f32 %v1753, %v1926
      %v1928 = vpop.f32.mrb[0].mxu0
      %1929 = vmatprep.mubr.f32.mxu0 0.0
      %1930 = vmatmul.mubr.f32.gmra.mrb[0].mxu0 %v1722
      %v1931 = vpop.f32.mrb[0].mxu0
      %v1932 = vadd.f32 %v1753, %v1931
      %v1933 = vpop.f32.mrb[0].mxu0
      %1934 = vmatprep.mubr.f32.mxu0 0.0
      %1935 = vmatmul.mubr.f32.gmra.mrb[0].mxu0 %v1723
      %v1936 = vpop.f32.mrb[0].mxu0
      %v1937 = vadd.f32 %v1753, %v1936
      %v1938 = vpop.f32.mrb[0].mxu0
      %1939 = vmatprep.mubr.f32.mxu0 0.0
      %1940 = vmatmul.mubr.f32.gmra.mrb[0].mxu0 %v1724
      %v1941 = vpop.f32.mrb[0].mxu0
      %v1942 = vadd.f32 %v1753, %v1941
      %v1943 = vpop.f32.mrb[0].mxu0
      %1944 = vmatprep.mubr.f32.mxu0 0.0
      %1945 = vmatmul.mubr.f32.gmra.mrb[0].mxu0 %v1725
      %v1946 = vpop.f32.mrb[0].mxu0
      %v1947 = vadd.f32 %v1753, %v1946
      %v1948 = vpop.f32.mrb[0].mxu0
      %1949 = vmatprep.mubr.f32.mxu0 0.0
      %1950 = vmatmul.mubr.f32.gmra.mrb[0].mxu0 %v1726
      %v1951 = vpop.f32.mrb[0].mxu0
      %v1952 = vadd.f32 %v1753, %v1951
      %v1953 = vpop.f32.mrb[0].mxu0
      %1954 = vmatprep.mubr.f32.mxu0 0.0
      %1955 = vmatmul.mubr.f32.gmra.mrb[0].mxu0 %v1727
      %v1956 = vpop.f32.mrb[0].mxu0
      %v1957 = vadd.f32 %v1753, %v1956
      %v1958 = vpop.f32.mrb[0].mxu0
      %1959 = vmatprep.mubr.f32.mxu0 0.0
      %1960 = vmatmul.mubr.f32.gmra.mrb[0].mxu0 %v1728
      %v1961 = vpop.f32.mrb[0].mxu0
      %v1962 = vadd.f32 %v1753, %v1961
      %v1963 = vpop.f32.mrb[0].mxu0
      %1964 = vmatprep.mubr.f32.mxu0 0.0
      %1965 = vmatmul.mubr.f32.gmra.mrb[0].mxu0 %v1729
      %v1966 = vpop.f32.mrb[0].mxu0
      %v1967 = vadd.f32 %v1753, %v1966
      %v1968 = vpop.f32.mrb[0].mxu0
      %1969 = vmatprep.mubr.f32.mxu0 0.0
      %1970 = vmatmul.mubr.f32.gmra.mrb[0].mxu0 %v1730
      %v1971 = vpop.f32.mrb[0].mxu0
      %v1972 = vadd.f32 %v1753, %v1971
      %v1973 = vpop.f32.mrb[0].mxu0
      %1974 = vmatprep.mubr.f32.mxu0 0.0
      %1975 = vmatmul.mubr.f32.gmra.mrb[0].mxu0 %v1731
      %v1976 = vpop.f32.mrb[0].mxu0
      %v1977 = vadd.f32 %v1753, %v1976
      %v1978 = vpop.f32.mrb[0].mxu0
      %1979 = vdwg.mxu0
      %v1980 = vtanh.pop %v1822
      %v1981 = vtanh.pop %v1827
      %v1982 = vtanh.pop %v1832
      %v1983 = vtanh.pop %v1837
      %v1984 = vtanh.pop %v1842
      %v1985 = vtanh.pop %v1847
      %v1986 = vtanh.pop %v1852
      %v1987 = vtanh.pop %v1857
      %v1988 = vtanh.pop %v1862
      %v1989 = vtanh.pop %v1867
      %v1990 = vtanh.pop %v1872
      %v1991 = vtanh.pop %v1877
      %v1992 = vtanh.pop %v1882
      %v1993 = vtanh.pop %v1887
      %v1994 = vtanh.pop %v1892
      %v1995 = vtanh.pop %v1897
      %v1996 = vtanh.pop %v1902
      %v1997 = vtanh.pop %v1907
      %v1998 = vtanh.pop %v1912
      %v1999 = vtanh.pop %v1917
      %v2000 = vtanh.pop %v1922
      %v2001 = vtanh.pop %v1927
      %v2002 = vtanh.pop %v1932
      %v2003 = vtanh.pop %v1937
      %v2004 = vtanh.pop %v1942
      %v2005 = vtanh.pop %v1947
      %v2006 = vtanh.pop %v1952
      %v2007 = vtanh.pop %v1957
      %v2008 = vtanh.pop %v1962
      %v2009 = vtanh.pop %v1967
      %v2010 = vtanh.pop %v1972
      %v2011 = vtanh.pop %v1977
      %v2012 = vld [vmem:[%s11] sm:$0xff]
      %v2013 = vld [vmem:[%s11 + $0x8] sm:$0xff]
      %v2014 = vld [vmem:[%s11 + $0x10] sm:$0xff]
      %v2015 = vld [vmem:[%s11 + $0x18] sm:$0xff]
      %v2016 = vld [vmem:[%s11 + $0x20] sm:$0xff]
      %v2017 = vld [vmem:[%s11 + $0x28] sm:$0xff]
      %v2018 = vld [vmem:[%s11 + $0x30] sm:$0xff]
      %v2019 = vld [vmem:[%s11 + $0x38] sm:$0xff]
      %v2020 = vld [vmem:[%s11 + $0x40] sm:$0xff]
      %v2021 = vld [vmem:[%s11 + $0x48] sm:$0xff]
      %v2022 = vld [vmem:[%s11 + $0x50] sm:$0xff]
      %v2023 = vld [vmem:[%s11 + $0x58] sm:$0xff]
      %v2024 = vld [vmem:[%s11 + $0x60] sm:$0xff]
      %v2025 = vld [vmem:[%s11 + $0x68] sm:$0xff]
      %v2026 = vld [vmem:[%s11 + $0x70] sm:$0xff]
      %v2027 = vld [vmem:[%s11 + $0x78] sm:$0xff]
      %v2028 = vld [vmem:[%s12] sm:$0x1]
      %v2030 = vlaneseq
      %v2031 = vshrl.u32 %v2030, 7
      %v2032 = vsub.s32 0, %v2031
      %v2033 = vrot.slane %v2028, %v2032
      %2035 = vmatprep.subr.mxu0 0.0
      %2036 = vmatpush1.msra.mxu0 %v2012
      %2037 = vmatprep.subr.mxu0 0.0
      %2038 = vmatpush1.msra.mxu0 %v2013
      %2039 = vmatprep.subr.mxu0 0.0
      %2040 = vmatpush1.msra.mxu0 %v2014
      %2041 = vmatprep.subr.mxu0 0.0
      %2042 = vmatpush1.msra.mxu0 %v2015
      %2043 = vmatprep.subr.mxu0 0.0
      %2044 = vmatpush1.msra.mxu0 %v2016
      %2045 = vmatprep.subr.mxu0 0.0
      %2046 = vmatpush1.msra.mxu0 %v2017
      %2047 = vmatprep.subr.mxu0 0.0
      %2048 = vmatpush1.msra.mxu0 %v2018
      %2049 = vmatprep.subr.mxu0 0.0
      %2050 = vmatpush1.msra.mxu0 %v2019
      %2051 = vmatprep.subr.mxu0 0.0
      %2052 = vmatpush1.msra.mxu0 %v2020
      %2053 = vmatprep.subr.mxu0 0.0
      %2054 = vmatpush1.msra.mxu0 %v2021
      %2055 = vmatprep.subr.mxu0 0.0
      %2056 = vmatpush1.msra.mxu0 %v2022
      %2057 = vmatprep.subr.mxu0 0.0
      %2058 = vmatpush1.msra.mxu0 %v2023
      %2059 = vmatprep.subr.mxu0 0.0
      %2060 = vmatpush1.msra.mxu0 %v2024
      %2061 = vmatprep.subr.mxu0 0.0
      %2062 = vmatpush1.msra.mxu0 %v2025
      %2063 = vmatprep.subr.mxu0 0.0
      %2064 = vmatpush1.msra.mxu0 %v2026
      %2065 = vmatprep.subr.mxu0 0.0
      %2066 = vmatpush1.msra.mxu0 %v2027
      %2067 = vmatprep.subr.mxu0 0.0
      %2068 = vmatpush1.msra.mxu0 0.0
      %2069 = vmatprep.subr.mxu0 0.0
      %2070 = vmatpush1.msra.mxu0 0.0
      %2071 = vmatprep.subr.mxu0 0.0
      %2072 = vmatpush1.msra.mxu0 0.0
      %2073 = vmatprep.subr.mxu0 0.0
      %2074 = vmatpush1.msra.mxu0 0.0
      %2075 = vmatprep.subr.mxu0 0.0
      %2076 = vmatpush1.msra.mxu0 0.0
      %2077 = vmatprep.subr.mxu0 0.0
      %2078 = vmatpush1.msra.mxu0 0.0
      %2079 = vmatprep.subr.mxu0 0.0
      %2080 = vmatpush1.msra.mxu0 0.0
      %2081 = vmatprep.subr.mxu0 0.0
      %2082 = vmatpush1.msra.mxu0 0.0
      %2083 = vmatprep.subr.mxu0 0.0
      %2084 = vmatpush1.msra.mxu0 0.0
      %2085 = vmatprep.subr.mxu0 0.0
      %2086 = vmatpush1.msra.mxu0 0.0
      %2087 = vmatprep.subr.mxu0 0.0
      %2088 = vmatpush1.msra.mxu0 0.0
      %2089 = vmatprep.subr.mxu0 0.0
      %2090 = vmatpush1.msra.mxu0 0.0
      %2091 = vmatprep.subr.mxu0 0.0
      %2092 = vmatpush1.msra.mxu0 0.0
      %2093 = vmatprep.subr.mxu0 0.0
      %2094 = vmatpush1.msra.mxu0 0.0
      %2095 = vmatprep.subr.mxu0 0.0
      %2096 = vmatpush1.msra.mxu0 0.0
      %2097 = vmatprep.subr.mxu0 0.0
      %2098 = vmatpush1.msra.mxu0 0.0
      %2099 = vmatprep.mubr.f32.mxu0 0.0
      %2100 = vmatmul.mubr.f32.gmra.mrb[0].mxu0 %v1980
      %v2101 = vpop.f32.mrb[0].mxu0
      %v2102 = vadd.f32 %v2033, %v2101
      %v2103 = vpop.f32.mrb[0].mxu0
      %2104 = vmatprep.mubr.f32.mxu0 0.0
      %2105 = vmatmul.mubr.f32.gmra.mrb[0].mxu0 %v1981
      %v2106 = vpop.f32.mrb[0].mxu0
      %v2107 = vadd.f32 %v2033, %v2106
      %v2108 = vpop.f32.mrb[0].mxu0
      %2109 = vmatprep.mubr.f32.mxu0 0.0
      %2110 = vmatmul.mubr.f32.gmra.mrb[0].mxu0 %v1982
      %v2111 = vpop.f32.mrb[0].mxu0
      %v2112 = vadd.f32 %v2033, %v2111
      %v2113 = vpop.f32.mrb[0].mxu0
      %2114 = vmatprep.mubr.f32.mxu0 0.0
      %2115 = vmatmul.mubr.f32.gmra.mrb[0].mxu0 %v1983
      %v2116 = vpop.f32.mrb[0].mxu0
      %v2117 = vadd.f32 %v2033, %v2116
      %v2118 = vpop.f32.mrb[0].mxu0
      %2119 = vmatprep.mubr.f32.mxu0 0.0
      %2120 = vmatmul.mubr.f32.gmra.mrb[0].mxu0 %v1984
      %v2121 = vpop.f32.mrb[0].mxu0
      %v2122 = vadd.f32 %v2033, %v2121
      %v2123 = vpop.f32.mrb[0].mxu0
      %2124 = vmatprep.mubr.f32.mxu0 0.0
      %2125 = vmatmul.mubr.f32.gmra.mrb[0].mxu0 %v1985
      %v2126 = vpop.f32.mrb[0].mxu0
      %v2127 = vadd.f32 %v2033, %v2126
      %v2128 = vpop.f32.mrb[0].mxu0
      %2129 = vmatprep.mubr.f32.mxu0 0.0
      %2130 = vmatmul.mubr.f32.gmra.mrb[0].mxu0 %v1986
      %v2131 = vpop.f32.mrb[0].mxu0
      %v2132 = vadd.f32 %v2033, %v2131
      %v2133 = vpop.f32.mrb[0].mxu0
      %2134 = vmatprep.mubr.f32.mxu0 0.0
      %2135 = vmatmul.mubr.f32.gmra.mrb[0].mxu0 %v1987
      %v2136 = vpop.f32.mrb[0].mxu0
      %v2137 = vadd.f32 %v2033, %v2136
      %v2138 = vpop.f32.mrb[0].mxu0
      %2139 = vmatprep.mubr.f32.mxu0 0.0
      %2140 = vmatmul.mubr.f32.gmra.mrb[0].mxu0 %v1988
      %v2141 = vpop.f32.mrb[0].mxu0
      %v2142 = vadd.f32 %v2033, %v2141
      %v2143 = vpop.f32.mrb[0].mxu0
      %2144 = vmatprep.mubr.f32.mxu0 0.0
      %2145 = vmatmul.mubr.f32.gmra.mrb[0].mxu0 %v1989
      %v2146 = vpop.f32.mrb[0].mxu0
      %v2147 = vadd.f32 %v2033, %v2146
      %v2148 = vpop.f32.mrb[0].mxu0
      %2149 = vmatprep.mubr.f32.mxu0 0.0
      %2150 = vmatmul.mubr.f32.gmra.mrb[0].mxu0 %v1990
      %v2151 = vpop.f32.mrb[0].mxu0
      %v2152 = vadd.f32 %v2033, %v2151
      %v2153 = vpop.f32.mrb[0].mxu0
      %2154 = vmatprep.mubr.f32.mxu0 0.0
      %2155 = vmatmul.mubr.f32.gmra.mrb[0].mxu0 %v1991
      %v2156 = vpop.f32.mrb[0].mxu0
      %v2157 = vadd.f32 %v2033, %v2156
      %v2158 = vpop.f32.mrb[0].mxu0
      %2159 = vmatprep.mubr.f32.mxu0 0.0
      %2160 = vmatmul.mubr.f32.gmra.mrb[0].mxu0 %v1992
      %v2161 = vpop.f32.mrb[0].mxu0
      %v2162 = vadd.f32 %v2033, %v2161
      %v2163 = vpop.f32.mrb[0].mxu0
      %2164 = vmatprep.mubr.f32.mxu0 0.0
      %2165 = vmatmul.mubr.f32.gmra.mrb[0].mxu0 %v1993
      %v2166 = vpop.f32.mrb[0].mxu0
      %v2167 = vadd.f32 %v2033, %v2166
      %v2168 = vpop.f32.mrb[0].mxu0
      %2169 = vmatprep.mubr.f32.mxu0 0.0
      %2170 = vmatmul.mubr.f32.gmra.mrb[0].mxu0 %v1994
      %v2171 = vpop.f32.mrb[0].mxu0
      %v2172 = vadd.f32 %v2033, %v2171
      %v2173 = vpop.f32.mrb[0].mxu0
      %2174 = vmatprep.mubr.f32.mxu0 0.0
      %2175 = vmatmul.mubr.f32.gmra.mrb[0].mxu0 %v1995
      %v2176 = vpop.f32.mrb[0].mxu0
      %v2177 = vadd.f32 %v2033, %v2176
      %v2178 = vpop.f32.mrb[0].mxu0
      %2179 = vmatprep.mubr.f32.mxu0 0.0
      %2180 = vmatmul.mubr.f32.gmra.mrb[0].mxu0 %v1996
      %v2181 = vpop.f32.mrb[0].mxu0
      %v2182 = vadd.f32 %v2033, %v2181
      %v2183 = vpop.f32.mrb[0].mxu0
      %2184 = vmatprep.mubr.f32.mxu0 0.0
      %2185 = vmatmul.mubr.f32.gmra.mrb[0].mxu0 %v1997
      %v2186 = vpop.f32.mrb[0].mxu0
      %v2187 = vadd.f32 %v2033, %v2186
      %v2188 = vpop.f32.mrb[0].mxu0
      %2189 = vmatprep.mubr.f32.mxu0 0.0
      %2190 = vmatmul.mubr.f32.gmra.mrb[0].mxu0 %v1998
      %v2191 = vpop.f32.mrb[0].mxu0
      %v2192 = vadd.f32 %v2033, %v2191
      %v2193 = vpop.f32.mrb[0].mxu0
      %2194 = vmatprep.mubr.f32.mxu0 0.0
      %2195 = vmatmul.mubr.f32.gmra.mrb[0].mxu0 %v1999
      %v2196 = vpop.f32.mrb[0].mxu0
      %v2197 = vadd.f32 %v2033, %v2196
      %v2198 = vpop.f32.mrb[0].mxu0
      %2199 = vmatprep.mubr.f32.mxu0 0.0
      %2200 = vmatmul.mubr.f32.gmra.mrb[0].mxu0 %v2000
      %v2201 = vpop.f32.mrb[0].mxu0
      %v2202 = vadd.f32 %v2033, %v2201
      %v2203 = vpop.f32.mrb[0].mxu0
      %2204 = vmatprep.mubr.f32.mxu0 0.0
      %2205 = vmatmul.mubr.f32.gmra.mrb[0].mxu0 %v2001
      %v2206 = vpop.f32.mrb[0].mxu0
      %v2207 = vadd.f32 %v2033, %v2206
      %v2208 = vpop.f32.mrb[0].mxu0
      %2209 = vmatprep.mubr.f32.mxu0 0.0
      %2210 = vmatmul.mubr.f32.gmra.mrb[0].mxu0 %v2002
      %v2211 = vpop.f32.mrb[0].mxu0
      %v2212 = vadd.f32 %v2033, %v2211
      %v2213 = vpop.f32.mrb[0].mxu0
      %2214 = vmatprep.mubr.f32.mxu0 0.0
      %2215 = vmatmul.mubr.f32.gmra.mrb[0].mxu0 %v2003
      %v2216 = vpop.f32.mrb[0].mxu0
      %v2217 = vadd.f32 %v2033, %v2216
      %v2218 = vpop.f32.mrb[0].mxu0
      %2219 = vmatprep.mubr.f32.mxu0 0.0
      %2220 = vmatmul.mubr.f32.gmra.mrb[0].mxu0 %v2004
      %v2221 = vpop.f32.mrb[0].mxu0
      %v2222 = vadd.f32 %v2033, %v2221
      %v2223 = vpop.f32.mrb[0].mxu0
      %2224 = vmatprep.mubr.f32.mxu0 0.0
      %2225 = vmatmul.mubr.f32.gmra.mrb[0].mxu0 %v2005
      %v2226 = vpop.f32.mrb[0].mxu0
      %v2227 = vadd.f32 %v2033, %v2226
      %v2228 = vpop.f32.mrb[0].mxu0
      %2229 = vmatprep.mubr.f32.mxu0 0.0
      %2230 = vmatmul.mubr.f32.gmra.mrb[0].mxu0 %v2006
      %v2231 = vpop.f32.mrb[0].mxu0
      %v2232 = vadd.f32 %v2033, %v2231
      %v2233 = vpop.f32.mrb[0].mxu0
      %2234 = vmatprep.mubr.f32.mxu0 0.0
      %2235 = vmatmul.mubr.f32.gmra.mrb[0].mxu0 %v2007
      %v2236 = vpop.f32.mrb[0].mxu0
      %v2237 = vadd.f32 %v2033, %v2236
      %v2238 = vpop.f32.mrb[0].mxu0
      %2239 = vmatprep.mubr.f32.mxu0 0.0
      %2240 = vmatmul.mubr.f32.gmra.mrb[0].mxu0 %v2008
      %v2241 = vpop.f32.mrb[0].mxu0
      %v2242 = vadd.f32 %v2033, %v2241
      %v2243 = vpop.f32.mrb[0].mxu0
      %2244 = vmatprep.mubr.f32.mxu0 0.0
      %2245 = vmatmul.mubr.f32.gmra.mrb[0].mxu0 %v2009
      %v2246 = vpop.f32.mrb[0].mxu0
      %v2247 = vadd.f32 %v2033, %v2246
      %v2248 = vpop.f32.mrb[0].mxu0
      %2249 = vmatprep.mubr.f32.mxu0 0.0
      %2250 = vmatmul.mubr.f32.gmra.mrb[0].mxu0 %v2010
      %v2251 = vpop.f32.mrb[0].mxu0
      %v2252 = vadd.f32 %v2033, %v2251
      %v2253 = vpop.f32.mrb[0].mxu0
      %2254 = vmatprep.mubr.f32.mxu0 0.0
      %2255 = vmatmul.mubr.f32.gmra.mrb[0].mxu0 %v2011
      %v2256 = vpop.f32.mrb[0].mxu0
      %v2257 = vadd.f32 %v2033, %v2256
      %v2258 = vpop.f32.mrb[0].mxu0
      %2259 = vdwg.mxu0
      %v2260 = vtanh.pop %v2102
      %v2261 = vtanh.pop %v2107
      %v2262 = vtanh.pop %v2112
      %v2263 = vtanh.pop %v2117
      %v2264 = vtanh.pop %v2122
      %v2265 = vtanh.pop %v2127
      %v2266 = vtanh.pop %v2132
      %v2267 = vtanh.pop %v2137
      %v2268 = vtanh.pop %v2142
      %v2269 = vtanh.pop %v2147
      %v2270 = vtanh.pop %v2152
      %v2271 = vtanh.pop %v2157
      %v2272 = vtanh.pop %v2162
      %v2273 = vtanh.pop %v2167
      %v2274 = vtanh.pop %v2172
      %v2275 = vtanh.pop %v2177
      %v2276 = vtanh.pop %v2182
      %v2277 = vtanh.pop %v2187
      %v2278 = vtanh.pop %v2192
      %v2279 = vtanh.pop %v2197
      %v2280 = vtanh.pop %v2202
      %v2281 = vtanh.pop %v2207
      %v2282 = vtanh.pop %v2212
      %v2283 = vtanh.pop %v2217
      %v2284 = vtanh.pop %v2222
      %v2285 = vtanh.pop %v2227
      %v2286 = vtanh.pop %v2232
      %v2287 = vtanh.pop %v2237
      %v2288 = vtanh.pop %v2242
      %v2289 = vtanh.pop %v2247
      %v2290 = vtanh.pop %v2252
      %v2291 = vtanh.pop %v2257
      %v2292 = vld [vmem:[%s13] sm:$0xff]
      %v2293 = vld [vmem:[%s13 + $0x8] sm:$0xff]
      %v2294 = vld [vmem:[%s13 + $0x10] sm:$0xff]
      %v2295 = vld [vmem:[%s13 + $0x18] sm:$0xff]
      %v2296 = vld [vmem:[%s13 + $0x20] sm:$0xff]
      %v2297 = vld [vmem:[%s13 + $0x28] sm:$0xff]
      %v2298 = vld [vmem:[%s13 + $0x30] sm:$0xff]
      %v2299 = vld [vmem:[%s13 + $0x38] sm:$0xff]
      %v2300 = vld [vmem:[%s13 + $0x40] sm:$0xff]
      %v2301 = vld [vmem:[%s13 + $0x48] sm:$0xff]
      %v2302 = vld [vmem:[%s13 + $0x50] sm:$0xff]
      %v2303 = vld [vmem:[%s13 + $0x58] sm:$0xff]
      %v2304 = vld [vmem:[%s13 + $0x60] sm:$0xff]
      %v2305 = vld [vmem:[%s13 + $0x68] sm:$0xff]
      %v2306 = vld [vmem:[%s13 + $0x70] sm:$0xff]
      %v2307 = vld [vmem:[%s13 + $0x78] sm:$0xff]
      %v2308 = vld [vmem:[%s14] sm:$0x1]
      %v2310 = vlaneseq
      %v2311 = vshrl.u32 %v2310, 7
      %v2312 = vsub.s32 0, %v2311
      %v2313 = vrot.slane %v2308, %v2312
      %2315 = vmatprep.subr.mxu0 0.0
      %2316 = vmatpush1.msra.mxu0 %v2292
      %2317 = vmatprep.subr.mxu0 0.0
      %2318 = vmatpush1.msra.mxu0 %v2293
      %2319 = vmatprep.subr.mxu0 0.0
      %2320 = vmatpush1.msra.mxu0 %v2294
      %2321 = vmatprep.subr.mxu0 0.0
      %2322 = vmatpush1.msra.mxu0 %v2295
      %2323 = vmatprep.subr.mxu0 0.0
      %2324 = vmatpush1.msra.mxu0 %v2296
      %2325 = vmatprep.subr.mxu0 0.0
      %2326 = vmatpush1.msra.mxu0 %v2297
      %2327 = vmatprep.subr.mxu0 0.0
      %2328 = vmatpush1.msra.mxu0 %v2298
      %2329 = vmatprep.subr.mxu0 0.0
      %2330 = vmatpush1.msra.mxu0 %v2299
      %2331 = vmatprep.subr.mxu0 0.0
      %2332 = vmatpush1.msra.mxu0 %v2300
      %2333 = vmatprep.subr.mxu0 0.0
      %2334 = vmatpush1.msra.mxu0 %v2301
      %2335 = vmatprep.subr.mxu0 0.0
      %2336 = vmatpush1.msra.mxu0 %v2302
      %2337 = vmatprep.subr.mxu0 0.0
      %2338 = vmatpush1.msra.mxu0 %v2303
      %2339 = vmatprep.subr.mxu0 0.0
      %2340 = vmatpush1.msra.mxu0 %v2304
      %2341 = vmatprep.subr.mxu0 0.0
      %2342 = vmatpush1.msra.mxu0 %v2305
      %2343 = vmatprep.subr.mxu0 0.0
      %2344 = vmatpush1.msra.mxu0 %v2306
      %2345 = vmatprep.subr.mxu0 0.0
      %2346 = vmatpush1.msra.mxu0 %v2307
      %2347 = vmatprep.subr.mxu0 0.0
      %2348 = vmatpush1.msra.mxu0 0.0
      %2349 = vmatprep.subr.mxu0 0.0
      %2350 = vmatpush1.msra.mxu0 0.0
      %2351 = vmatprep.subr.mxu0 0.0
      %2352 = vmatpush1.msra.mxu0 0.0
      %2353 = vmatprep.subr.mxu0 0.0
      %2354 = vmatpush1.msra.mxu0 0.0
      %2355 = vmatprep.subr.mxu0 0.0
      %2356 = vmatpush1.msra.mxu0 0.0
      %2357 = vmatprep.subr.mxu0 0.0
      %2358 = vmatpush1.msra.mxu0 0.0
      %2359 = vmatprep.subr.mxu0 0.0
      %2360 = vmatpush1.msra.mxu0 0.0
      %2361 = vmatprep.subr.mxu0 0.0
      %2362 = vmatpush1.msra.mxu0 0.0
      %2363 = vmatprep.subr.mxu0 0.0
      %2364 = vmatpush1.msra.mxu0 0.0
      %2365 = vmatprep.subr.mxu0 0.0
      %2366 = vmatpush1.msra.mxu0 0.0
      %2367 = vmatprep.subr.mxu0 0.0
      %2368 = vmatpush1.msra.mxu0 0.0
      %2369 = vmatprep.subr.mxu0 0.0
      %2370 = vmatpush1.msra.mxu0 0.0
      %2371 = vmatprep.subr.mxu0 0.0
      %2372 = vmatpush1.msra.mxu0 0.0
      %2373 = vmatprep.subr.mxu0 0.0
      %2374 = vmatpush1.msra.mxu0 0.0
      %2375 = vmatprep.subr.mxu0 0.0
      %2376 = vmatpush1.msra.mxu0 0.0
      %2377 = vmatprep.subr.mxu0 0.0
      %2378 = vmatpush1.msra.mxu0 0.0
      %2379 = vmatprep.mubr.f32.mxu0 0.0
      %2380 = vmatmul.mubr.f32.gmra.mrb[0].mxu0 %v2260
      %v2381 = vpop.f32.mrb[0].mxu0
      %v2382 = vadd.f32 %v2313, %v2381
      %v2383 = vpop.f32.mrb[0].mxu0
      %2384 = vmatprep.mubr.f32.mxu0 0.0
      %2385 = vmatmul.mubr.f32.gmra.mrb[0].mxu0 %v2261
      %v2386 = vpop.f32.mrb[0].mxu0
      %v2387 = vadd.f32 %v2313, %v2386
      %v2388 = vpop.f32.mrb[0].mxu0
      %2389 = vmatprep.mubr.f32.mxu0 0.0
      %2390 = vmatmul.mubr.f32.gmra.mrb[0].mxu0 %v2262
      %v2391 = vpop.f32.mrb[0].mxu0
      %v2392 = vadd.f32 %v2313, %v2391
      %v2393 = vpop.f32.mrb[0].mxu0
      %2394 = vmatprep.mubr.f32.mxu0 0.0
      %2395 = vmatmul.mubr.f32.gmra.mrb[0].mxu0 %v2263
      %v2396 = vpop.f32.mrb[0].mxu0
      %v2397 = vadd.f32 %v2313, %v2396
      %v2398 = vpop.f32.mrb[0].mxu0
      %2399 = vmatprep.mubr.f32.mxu0 0.0
      %2400 = vmatmul.mubr.f32.gmra.mrb[0].mxu0 %v2264
      %v2401 = vpop.f32.mrb[0].mxu0
      %v2402 = vadd.f32 %v2313, %v2401
      %v2403 = vpop.f32.mrb[0].mxu0
      %2404 = vmatprep.mubr.f32.mxu0 0.0
      %2405 = vmatmul.mubr.f32.gmra.mrb[0].mxu0 %v2265
      %v2406 = vpop.f32.mrb[0].mxu0
      %v2407 = vadd.f32 %v2313, %v2406
      %v2408 = vpop.f32.mrb[0].mxu0
      %2409 = vmatprep.mubr.f32.mxu0 0.0
      %2410 = vmatmul.mubr.f32.gmra.mrb[0].mxu0 %v2266
      %v2411 = vpop.f32.mrb[0].mxu0
      %v2412 = vadd.f32 %v2313, %v2411
      %v2413 = vpop.f32.mrb[0].mxu0
      %2414 = vmatprep.mubr.f32.mxu0 0.0
      %2415 = vmatmul.mubr.f32.gmra.mrb[0].mxu0 %v2267
      %v2416 = vpop.f32.mrb[0].mxu0
      %v2417 = vadd.f32 %v2313, %v2416
      %v2418 = vpop.f32.mrb[0].mxu0
      %2419 = vmatprep.mubr.f32.mxu0 0.0
      %2420 = vmatmul.mubr.f32.gmra.mrb[0].mxu0 %v2268
      %v2421 = vpop.f32.mrb[0].mxu0
      %v2422 = vadd.f32 %v2313, %v2421
      %v2423 = vpop.f32.mrb[0].mxu0
      %2424 = vmatprep.mubr.f32.mxu0 0.0
      %2425 = vmatmul.mubr.f32.gmra.mrb[0].mxu0 %v2269
      %v2426 = vpop.f32.mrb[0].mxu0
      %v2427 = vadd.f32 %v2313, %v2426
      %v2428 = vpop.f32.mrb[0].mxu0
      %2429 = vmatprep.mubr.f32.mxu0 0.0
      %2430 = vmatmul.mubr.f32.gmra.mrb[0].mxu0 %v2270
      %v2431 = vpop.f32.mrb[0].mxu0
      %v2432 = vadd.f32 %v2313, %v2431
      %v2433 = vpop.f32.mrb[0].mxu0
      %2434 = vmatprep.mubr.f32.mxu0 0.0
      %2435 = vmatmul.mubr.f32.gmra.mrb[0].mxu0 %v2271
      %v2436 = vpop.f32.mrb[0].mxu0
      %v2437 = vadd.f32 %v2313, %v2436
      %v2438 = vpop.f32.mrb[0].mxu0
      %2439 = vmatprep.mubr.f32.mxu0 0.0
      %2440 = vmatmul.mubr.f32.gmra.mrb[0].mxu0 %v2272
      %v2441 = vpop.f32.mrb[0].mxu0
      %v2442 = vadd.f32 %v2313, %v2441
      %v2443 = vpop.f32.mrb[0].mxu0
      %2444 = vmatprep.mubr.f32.mxu0 0.0
      %2445 = vmatmul.mubr.f32.gmra.mrb[0].mxu0 %v2273
      %v2446 = vpop.f32.mrb[0].mxu0
      %v2447 = vadd.f32 %v2313, %v2446
      %v2448 = vpop.f32.mrb[0].mxu0
      %2449 = vmatprep.mubr.f32.mxu0 0.0
      %2450 = vmatmul.mubr.f32.gmra.mrb[0].mxu0 %v2274
      %v2451 = vpop.f32.mrb[0].mxu0
      %v2452 = vadd.f32 %v2313, %v2451
      %v2453 = vpop.f32.mrb[0].mxu0
      %2454 = vmatprep.mubr.f32.mxu0 0.0
      %2455 = vmatmul.mubr.f32.gmra.mrb[0].mxu0 %v2275
      %v2456 = vpop.f32.mrb[0].mxu0
      %v2457 = vadd.f32 %v2313, %v2456
      %v2458 = vpop.f32.mrb[0].mxu0
      %2459 = vmatprep.mubr.f32.mxu0 0.0
      %2460 = vmatmul.mubr.f32.gmra.mrb[0].mxu0 %v2276
      %v2461 = vpop.f32.mrb[0].mxu0
      %v2462 = vadd.f32 %v2313, %v2461
      %v2463 = vpop.f32.mrb[0].mxu0
      %2464 = vmatprep.mubr.f32.mxu0 0.0
      %2465 = vmatmul.mubr.f32.gmra.mrb[0].mxu0 %v2277
      %v2466 = vpop.f32.mrb[0].mxu0
      %v2467 = vadd.f32 %v2313, %v2466
      %v2468 = vpop.f32.mrb[0].mxu0
      %2469 = vmatprep.mubr.f32.mxu0 0.0
      %2470 = vmatmul.mubr.f32.gmra.mrb[0].mxu0 %v2278
      %v2471 = vpop.f32.mrb[0].mxu0
      %v2472 = vadd.f32 %v2313, %v2471
      %v2473 = vpop.f32.mrb[0].mxu0
      %2474 = vmatprep.mubr.f32.mxu0 0.0
      %2475 = vmatmul.mubr.f32.gmra.mrb[0].mxu0 %v2279
      %v2476 = vpop.f32.mrb[0].mxu0
      %v2477 = vadd.f32 %v2313, %v2476
      %v2478 = vpop.f32.mrb[0].mxu0
      %2479 = vmatprep.mubr.f32.mxu0 0.0
      %2480 = vmatmul.mubr.f32.gmra.mrb[0].mxu0 %v2280
      %v2481 = vpop.f32.mrb[0].mxu0
      %v2482 = vadd.f32 %v2313, %v2481
      %v2483 = vpop.f32.mrb[0].mxu0
      %2484 = vmatprep.mubr.f32.mxu0 0.0
      %2485 = vmatmul.mubr.f32.gmra.mrb[0].mxu0 %v2281
      %v2486 = vpop.f32.mrb[0].mxu0
      %v2487 = vadd.f32 %v2313, %v2486
      %v2488 = vpop.f32.mrb[0].mxu0
      %2489 = vmatprep.mubr.f32.mxu0 0.0
      %2490 = vmatmul.mubr.f32.gmra.mrb[0].mxu0 %v2282
      %v2491 = vpop.f32.mrb[0].mxu0
      %v2492 = vadd.f32 %v2313, %v2491
      %v2493 = vpop.f32.mrb[0].mxu0
      %2494 = vmatprep.mubr.f32.mxu0 0.0
      %2495 = vmatmul.mubr.f32.gmra.mrb[0].mxu0 %v2283
      %v2496 = vpop.f32.mrb[0].mxu0
      %v2497 = vadd.f32 %v2313, %v2496
      %v2498 = vpop.f32.mrb[0].mxu0
      %2499 = vmatprep.mubr.f32.mxu0 0.0
      %2500 = vmatmul.mubr.f32.gmra.mrb[0].mxu0 %v2284
      %v2501 = vpop.f32.mrb[0].mxu0
      %v2502 = vadd.f32 %v2313, %v2501
      %v2503 = vpop.f32.mrb[0].mxu0
      %2504 = vmatprep.mubr.f32.mxu0 0.0
      %2505 = vmatmul.mubr.f32.gmra.mrb[0].mxu0 %v2285
      %v2506 = vpop.f32.mrb[0].mxu0
      %v2507 = vadd.f32 %v2313, %v2506
      %v2508 = vpop.f32.mrb[0].mxu0
      %2509 = vmatprep.mubr.f32.mxu0 0.0
      %2510 = vmatmul.mubr.f32.gmra.mrb[0].mxu0 %v2286
      %v2511 = vpop.f32.mrb[0].mxu0
      %v2512 = vadd.f32 %v2313, %v2511
      %v2513 = vpop.f32.mrb[0].mxu0
      %2514 = vmatprep.mubr.f32.mxu0 0.0
      %2515 = vmatmul.mubr.f32.gmra.mrb[0].mxu0 %v2287
      %v2516 = vpop.f32.mrb[0].mxu0
      %v2517 = vadd.f32 %v2313, %v2516
      %v2518 = vpop.f32.mrb[0].mxu0
      %2519 = vmatprep.mubr.f32.mxu0 0.0
      %2520 = vmatmul.mubr.f32.gmra.mrb[0].mxu0 %v2288
      %v2521 = vpop.f32.mrb[0].mxu0
      %v2522 = vadd.f32 %v2313, %v2521
      %v2523 = vpop.f32.mrb[0].mxu0
      %2524 = vmatprep.mubr.f32.mxu0 0.0
      %2525 = vmatmul.mubr.f32.gmra.mrb[0].mxu0 %v2289
      %v2526 = vpop.f32.mrb[0].mxu0
      %v2527 = vadd.f32 %v2313, %v2526
      %v2528 = vpop.f32.mrb[0].mxu0
      %2529 = vmatprep.mubr.f32.mxu0 0.0
      %2530 = vmatmul.mubr.f32.gmra.mrb[0].mxu0 %v2290
      %v2531 = vpop.f32.mrb[0].mxu0
      %v2532 = vadd.f32 %v2313, %v2531
      %v2533 = vpop.f32.mrb[0].mxu0
      %2534 = vmatprep.mubr.f32.mxu0 0.0
      %2535 = vmatmul.mubr.f32.gmra.mrb[0].mxu0 %v2291
      %v2536 = vpop.f32.mrb[0].mxu0
      %v2537 = vadd.f32 %v2313, %v2536
      %v2538 = vpop.f32.mrb[0].mxu0
      %2539 = vdwg.mxu0
      %2540 = vst.msk [vmem:[%s496] sm:$0xff] %vm538, %v2382
      %2541 = vst.msk [vmem:[%s496 + $0x8] sm:$0xff] %vm538, %v2387
      %2542 = vst.msk [vmem:[%s496 + $0x10] sm:$0xff] %vm538, %v2392
      %2543 = vst.msk [vmem:[%s496 + $0x18] sm:$0xff] %vm538, %v2397
      %2544 = vst.msk [vmem:[%s496 + $0x20] sm:$0xff] %vm538, %v2402
      %2545 = vst.msk [vmem:[%s496 + $0x28] sm:$0xff] %vm538, %v2407
      %2546 = vst.msk [vmem:[%s496 + $0x30] sm:$0xff] %vm538, %v2412
      %2547 = vst.msk [vmem:[%s496 + $0x38] sm:$0xff] %vm538, %v2417
      %2548 = vst.msk [vmem:[%s496 + $0x40] sm:$0xff] %vm538, %v2422
      %2549 = vst.msk [vmem:[%s496 + $0x48] sm:$0xff] %vm538, %v2427
      %2550 = vst.msk [vmem:[%s496 + $0x50] sm:$0xff] %vm538, %v2432
      %2551 = vst.msk [vmem:[%s496 + $0x58] sm:$0xff] %vm538, %v2437
      %2552 = vst.msk [vmem:[%s496 + $0x60] sm:$0xff] %vm538, %v2442
      %2553 = vst.msk [vmem:[%s496 + $0x68] sm:$0xff] %vm538, %v2447
      %2554 = vst.msk [vmem:[%s496 + $0x70] sm:$0xff] %vm538, %v2452
      %2555 = vst.msk [vmem:[%s496 + $0x78] sm:$0xff] %vm538, %v2457
      %2556 = vst.msk [vmem:[%s496 + $0x80] sm:$0xff] %vm538, %v2462
      %2557 = vst.msk [vmem:[%s496 + $0x88] sm:$0xff] %vm538, %v2467
      %2558 = vst.msk [vmem:[%s496 + $0x90] sm:$0xff] %vm538, %v2472
      %2559 = vst.msk [vmem:[%s496 + $0x98] sm:$0xff] %vm538, %v2477
      %2560 = vst.msk [vmem:[%s496 + $0xa0] sm:$0xff] %vm538, %v2482
      %2561 = vst.msk [vmem:[%s496 + $0xa8] sm:$0xff] %vm538, %v2487
      %2562 = vst.msk [vmem:[%s496 + $0xb0] sm:$0xff] %vm538, %v2492
      %2563 = vst.msk [vmem:[%s496 + $0xb8] sm:$0xff] %vm538, %v2497
      %2564 = vst.msk [vmem:[%s496 + $0xc0] sm:$0xff] %vm538, %v2502
      %2565 = vst.msk [vmem:[%s496 + $0xc8] sm:$0xff] %vm538, %v2507
      %2566 = vst.msk [vmem:[%s496 + $0xd0] sm:$0xff] %vm538, %v2512
      %2567 = vst.msk [vmem:[%s496 + $0xd8] sm:$0xff] %vm538, %v2517
      %2568 = vst.msk [vmem:[%s496 + $0xe0] sm:$0xff] %vm538, %v2522
      %2569 = vst.msk [vmem:[%s496 + $0xe8] sm:$0xff] %vm538, %v2527
      %2570 = vst.msk [vmem:[%s496 + $0xf0] sm:$0xff] %vm538, %v2532
      %2571 = vst.msk [vmem:[%s496 + $0xf8] sm:$0xff] %vm538, %v2537
      %s2572 = smul.u32 32, %s26
      %p2573 = scmp.lt.s32.totalorder %s2572, 63
      %s2574 = scalar_select %p2573, %s2572, 63
      %s2575 = smul.addr %s2574, 8
      %s2576 = scalar_lea.vmem %s15, %s2575
      // Predicated region
      $region81: #{mlp_forward.1} parent=79 // pred_check
        %p2577 = pneg %p364
      $region82: #{mlp_forward.1} parent=79 // pred_check_branch
        %2579 = sbr.rel (%p2577) target = $region84
      $region83: #{mlp_forward.1} parent=79 // pred_region
        %s2580 = smul.u32 32, %s26
      $region84: #{mlp_forward.1} parent=79 // pred_fallthru
        _
    $region80: #{mlp_forward.1} parent=5 // pred_fallthru
      _
    %p2581 = scmp.le.s32.totalorder 2, %s21
    // Predicated region
    $region85: #{mlp_forward.1} parent=5 // pred_check
      %p2582 = pneg %p2581
    $region86: #{mlp_forward.1} parent=5 // pred_check_branch
      %2584 = sbr.rel (%p2582) target = $region88
    $region87: #{mlp_forward.1} parent=5 // pred_region
      %s2585 = ssub.s32 %s21, 2
      // Predicated region
      $region89: #{mlp_forward.1} parent=87 // pred_check
        %p2586 = pneg %p370
      $region90: #{mlp_forward.1} parent=87 // pred_check_branch
        %2588 = sbr.rel (%p2586) target = $region92
      $region91: #{mlp_forward.1} parent=87 // pred_region
        %s2589 = smul.u32 32, %s27
        %p2590 = scmp.lt.s32.totalorder %s2589, 63
        %s2591 = scalar_select %p2590, %s2589, 63
        %s2592 = smul.addr %s2591, 8
        %s2593 = scalar_lea.vmem %s15, %s2592
      $region92: #{mlp_forward.1} parent=87 // pred_fallthru
        _
    $region88: #{mlp_forward.1} parent=5 // pred_fallthru
      _
  $region6: #{mlp_forward.1} parent=0 // loop_footer
    %s25 = sadd.s32 1, %s21
  $region7: #{mlp_forward.1} parent=0 // loop_footer_branch
    %20 = sbr.rel target = $region3
  $region8: #{mlp_forward.1} parent=0 // loop_exit
    _

</llo_original>
